<compile_context>
chip_gen: v7x
topology: tpu7x:2x2x1
jax: 0.10.0
libtpu: 0.0.40
codegen_flags: <defaults>
</compile_context>

<pallas_src>
import jax
import jax.numpy as jnp
from jax.experimental import pallas as pl
from jax.experimental.pallas import tpu as pltpu


def _vae_kernel(x_ref, eps_ref,
                w_enc_ref, b_enc_ref,
                w_mulv_ref, b_mulv_ref,
                w_dec_ref, b_dec_ref,
                recon_ref, mu_ref, logvar_ref):
    latent = mu_ref.shape[-1]

    x = x_ref[...]          # (TM, d_in)  bf16
    eps = eps_ref[...]      # (TM, latent) f32

    # encoder(x): Linear + ReLU -> global_features (f32)
    gf = jnp.dot(x, w_enc_ref[...], preferred_element_type=jnp.float32)
    gf = jnp.maximum(gf + b_enc_ref[...], 0.0)                      # (TM, latent)

    # fused fc_mu / fc_logvar: one 2*latent-wide matmul, then static split
    mulv = jnp.dot(gf.astype(jnp.bfloat16), w_mulv_ref[...],
                   preferred_element_type=jnp.float32) + b_mulv_ref[...]
    mu = mulv[:, :latent]
    logvar = mulv[:, latent:]

    # reparameterize (f32): z = mu + eps * exp(0.5 * logvar)
    z = mu + eps * jnp.exp(0.5 * logvar)

    # decoder(z): Linear back to flattened input size
    recon = jnp.dot(z.astype(jnp.bfloat16), w_dec_ref[...],
                    preferred_element_type=jnp.float32) + b_dec_ref[...]

    recon_ref[...] = recon
    mu_ref[...] = mu
    logvar_ref[...] = logvar


def vae_forward(x_nchw, eps, params, *, block_m=128):
    """x_nchw: (B, C, H, W) float32, eps: (B, latent) float32.
    Returns (reconstructed_x (B,C,H,W), mu (B,latent), logvar (B,latent))."""
    B, C, H, W = x_nchw.shape
    d_in = C * H * W
    latent = params["w_mu"].shape[0]

    # ---- parameter prep: fuse mu/logvar, cast weights to bf16 ----
    w_enc = params["w_enc"].astype(jnp.bfloat16)                      # (d_in, latent)
    w_mulv = jnp.concatenate([params["w_mu"], params["w_lv"]],
                             axis=1).astype(jnp.bfloat16)             # (latent, 2*latent)
    w_dec = params["w_dec"].astype(jnp.bfloat16)                      # (latent, d_in)
    b_enc = params["b_enc"].astype(jnp.float32)                       # (1, latent)
    b_mulv = jnp.concatenate([params["b_mu"], params["b_lv"]],
                             axis=1).astype(jnp.float32)              # (1, 2*latent)
    b_dec = params["b_dec"].astype(jnp.float32)                       # (1, d_in)

    # ---- pad batch (sublane) dim to a multiple of the batch tile ----
    b8 = ((B + 7) // 8) * 8                    # multiple of 8 (f32 sublane tile)
    tm = min(block_m, b8)
    b_pad = ((B + tm - 1) // tm) * tm

    x2d = x_nchw.reshape(B, d_in).astype(jnp.bfloat16)
    eps_p = eps.astype(jnp.float32)
    if b_pad != B:
        x2d = jnp.pad(x2d, ((0, b_pad - B), (0, 0)))
        eps_p = jnp.pad(eps_p, ((0, b_pad - B), (0, 0)))

    grid = (b_pad // tm,)

    batch_tile = lambda i: (i, 0)
    resident = lambda i: (0, 0)   # same block every step -> DMA'd once, stays in VMEM

    recon2d, mu, logvar = pl.pallas_call(
        _vae_kernel,
        grid=grid,
        out_shape=(
            jax.ShapeDtypeStruct((b_pad, d_in), jnp.float32),
            jax.ShapeDtypeStruct((b_pad, latent), jnp.float32),
            jax.ShapeDtypeStruct((b_pad, latent), jnp.float32),
        ),
        in_specs=[
            pl.BlockSpec((tm, d_in), batch_tile),            # x
            pl.BlockSpec((tm, latent), batch_tile),          # eps
            pl.BlockSpec((d_in, latent), resident),          # w_enc
            pl.BlockSpec((1, latent), resident),             # b_enc
            pl.BlockSpec((latent, 2 * latent), resident),    # w_mu|w_lv fused
            pl.BlockSpec((1, 2 * latent), resident),         # b_mu|b_lv fused
            pl.BlockSpec((latent, d_in), resident),          # w_dec
            pl.BlockSpec((1, d_in), resident),               # b_dec
        ],
        out_specs=(
            pl.BlockSpec((tm, d_in), batch_tile),
            pl.BlockSpec((tm, latent), batch_tile),
            pl.BlockSpec((tm, latent), batch_tile),
        ),
        compiler_params=pltpu.CompilerParams(
            dimension_semantics=("parallel",),
            vmem_limit_bytes=64 << 20,
        ),
    )(x2d, eps_p, w_enc, b_enc, w_mulv, b_mulv, w_dec, b_dec)

    recon = recon2d[:B].reshape(B, C, H, W)
    return recon, mu[:B], logvar[:B]


def init_params(key, d_in, latent):
    ks = jax.random.split(key, 5)

    def lin(k, fan_in, fan_out):
        # weight stored (in, out) so the kernel does x @ W (== torch x @ W.T)
        w = jax.random.normal(k, (fan_in, fan_out), jnp.float32) * (1.0 / jnp.sqrt(fan_in))
        b = jnp.zeros((1, fan_out), jnp.float32)
        return w, b

    w_enc, b_enc = lin(ks[0], d_in, latent)
    w_mu, b_mu = lin(ks[1], latent, latent)
    w_lv, b_lv = lin(ks[2], latent, latent)
    w_dec, b_dec = lin(ks[3], latent, d_in)
    return dict(w_enc=w_enc, b_enc=b_enc, w_mu=w_mu, b_mu=b_mu,
                w_lv=w_lv, b_lv=b_lv, w_dec=w_dec, b_dec=b_dec)


if __name__ == "__main__":
    B, C, H, W = 2, 4, 16, 16
    latent_dim = 128
    d_in = C * H * W

    key = jax.random.PRNGKey(0)
    k_x, k_eps, k_p = jax.random.split(key, 3)

    x = jax.random.normal(k_x, (B, C, H, W), jnp.float32)
    # eps ~ N(0,1), matching torch.randn_like(std); drawn outside the kernel.
    eps = jax.random.normal(k_eps, (B, latent_dim), jnp.float32)
    params = init_params(k_p, d_in, latent_dim)

    recon, mu, logvar = vae_forward(x, eps, params)
    jax.block_until_ready((recon, mu, logvar))

    # ---- reference with the same bf16-weight / f32-accumulate math ----
    x2d_b = x.reshape(B, d_in).astype(jnp.bfloat16)
    we, wm, wl, wd = (params["w_enc"].astype(jnp.bfloat16),
                      params["w_mu"].astype(jnp.bfloat16),
                      params["w_lv"].astype(jnp.bfloat16),
                      params["w_dec"].astype(jnp.bfloat16))
    gf_r = jnp.maximum(jnp.dot(x2d_b, we, preferred_element_type=jnp.float32)
                       + params["b_enc"], 0.0)
    gf_b = gf_r.astype(jnp.bfloat16)
    mu_r = jnp.dot(gf_b, wm, preferred_element_type=jnp.float32) + params["b_mu"]
    lv_r = jnp.dot(gf_b, wl, preferred_element_type=jnp.float32) + params["b_lv"]
    z_r = mu_r + eps * jnp.exp(0.5 * lv_r)
    recon_r = (jnp.dot(z_r.astype(jnp.bfloat16), wd,
                       preferred_element_type=jnp.float32)
               + params["b_dec"]).reshape(B, C, H, W)

    assert jnp.allclose(mu, mu_r, atol=1e-2, rtol=1e-2)
    assert jnp.allclose(logvar, lv_r, atol=1e-2, rtol=1e-2)
    assert jnp.allclose(recon, recon_r, atol=2e-2, rtol=2e-2)

    print("KERNEL_OK")
</pallas_src>

<mosaic_0001>
module attributes {stable_mosaic.version = 11 : i64} {
  func.func @_vae_kernel(%arg0: i32, %arg1: memref<8x1024xbf16, #tpu.memory_space<vmem>>, %arg2: memref<8x128xf32, #tpu.memory_space<vmem>>, %arg3: memref<1024x128xbf16, #tpu.memory_space<vmem>>, %arg4: memref<1x128xf32, #tpu.memory_space<vmem>>, %arg5: memref<128x256xbf16, #tpu.memory_space<vmem>>, %arg6: memref<1x256xf32, #tpu.memory_space<vmem>>, %arg7: memref<128x1024xbf16, #tpu.memory_space<vmem>>, %arg8: memref<1x1024xf32, #tpu.memory_space<vmem>>, %arg9: memref<8x1024xf32, #tpu.memory_space<vmem>>, %arg10: memref<8x128xf32, #tpu.memory_space<vmem>>, %arg11: memref<8x128xf32, #tpu.memory_space<vmem>>) attributes {dimension_semantics = [#tpu.dimension_semantics<parallel>], iteration_bounds = array<i64: 1>, scalar_prefetch = 0 : i64, scratch_operands = 0 : i64, tpu.core_type = #tpu.core_type<tc>, window_params = [{transform_indices = @transform_0, window_bounds = array<i64: 8, 1024>}, {transform_indices = @transform_1, window_bounds = array<i64: 8, 128>}, {pipeline_mode = #tpu.pipeline_mode<synchronous>, transform_indices = @transform_2, window_bounds = array<i64: 1024, 128>}, {pipeline_mode = #tpu.pipeline_mode<synchronous>, transform_indices = @transform_3, window_bounds = array<i64: 1, 128>}, {pipeline_mode = #tpu.pipeline_mode<synchronous>, transform_indices = @transform_4, window_bounds = array<i64: 128, 256>}, {pipeline_mode = #tpu.pipeline_mode<synchronous>, transform_indices = @transform_5, window_bounds = array<i64: 1, 256>}, {pipeline_mode = #tpu.pipeline_mode<synchronous>, transform_indices = @transform_6, window_bounds = array<i64: 128, 1024>}, {pipeline_mode = #tpu.pipeline_mode<synchronous>, transform_indices = @transform_7, window_bounds = array<i64: 1, 1024>}, {transform_indices = @transform_8, window_bounds = array<i64: 8, 1024>}, {transform_indices = @transform_9, window_bounds = array<i64: 8, 128>}, {transform_indices = @transform_10, window_bounds = array<i64: 8, 128>}]} {
    %c0 = arith.constant 0 : index
    %c0_0 = arith.constant 0 : index
    %0 = vector.load %arg1[%c0, %c0_0] : memref<8x1024xbf16, #tpu.memory_space<vmem>>, vector<8x1024xbf16>
    %c0_1 = arith.constant 0 : index
    %c0_2 = arith.constant 0 : index
    %1 = vector.load %arg2[%c0_1, %c0_2] : memref<8x128xf32, #tpu.memory_space<vmem>>, vector<8x128xf32>
    %c0_3 = arith.constant 0 : index
    %c0_4 = arith.constant 0 : index
    %2 = vector.load %arg3[%c0_3, %c0_4] : memref<1024x128xbf16, #tpu.memory_space<vmem>>, vector<1024x128xbf16>
    %cst = arith.constant dense<0.000000e+00> : vector<8x128xf32>
    %3 = tpu.matmul %0, %2, %cst {dimension_numbers = #tpu.dot_dimension_numbers<[1], [0], [0], [1], [0, 0, 1, 1], [], []>} : vector<8x1024xbf16>, vector<1024x128xbf16>, vector<8x128xf32> -> vector<8x128xf32>
    %c0_5 = arith.constant 0 : index
    %c0_6 = arith.constant 0 : index
    %4 = vector.load %arg4[%c0_5, %c0_6] : memref<1x128xf32, #tpu.memory_space<vmem>>, vector<1x128xf32>
    %5 = vector.broadcast %4 : vector<1x128xf32> to vector<8x128xf32>
    %6 = arith.addf %3, %5 : vector<8x128xf32>
    %cst_7 = arith.constant 0.000000e+00 : f32
    %7 = vector.broadcast %cst_7 : f32 to vector<8x128xf32>
    %8 = arith.maximumf %6, %7 : vector<8x128xf32>
    %9 = arith.truncf %8 : vector<8x128xf32> to vector<8x128xbf16>
    %c0_8 = arith.constant 0 : index
    %c0_9 = arith.constant 0 : index
    %10 = vector.load %arg5[%c0_8, %c0_9] : memref<128x256xbf16, #tpu.memory_space<vmem>>, vector<128x256xbf16>
    %cst_10 = arith.constant dense<0.000000e+00> : vector<8x256xf32>
    %11 = tpu.matmul %9, %10, %cst_10 {dimension_numbers = #tpu.dot_dimension_numbers<[1], [0], [0], [1], [0, 0, 1, 1], [], []>} : vector<8x128xbf16>, vector<128x256xbf16>, vector<8x256xf32> -> vector<8x256xf32>
    %c0_11 = arith.constant 0 : index
    %c0_12 = arith.constant 0 : index
    %12 = vector.load %arg6[%c0_11, %c0_12] : memref<1x256xf32, #tpu.memory_space<vmem>>, vector<1x256xf32>
    %13 = vector.broadcast %12 : vector<1x256xf32> to vector<8x256xf32>
    %14 = arith.addf %11, %13 : vector<8x256xf32>
    %15 = vector.extract_strided_slice %14 {offsets = [0, 0], sizes = [8, 128], strides = [1, 1]} : vector<8x256xf32> to vector<8x128xf32>
    %16 = vector.extract_strided_slice %14 {offsets = [0, 128], sizes = [8, 128], strides = [1, 1]} : vector<8x256xf32> to vector<8x128xf32>
    %cst_13 = arith.constant 5.000000e-01 : f32
    %17 = vector.broadcast %cst_13 : f32 to vector<8x128xf32>
    %18 = arith.mulf %17, %16 : vector<8x128xf32>
    %19 = math.exp %18 : vector<8x128xf32>
    %20 = arith.mulf %1, %19 : vector<8x128xf32>
    %21 = arith.addf %15, %20 : vector<8x128xf32>
    %22 = arith.truncf %21 : vector<8x128xf32> to vector<8x128xbf16>
    %c0_14 = arith.constant 0 : index
    %c0_15 = arith.constant 0 : index
    %23 = vector.load %arg7[%c0_14, %c0_15] : memref<128x1024xbf16, #tpu.memory_space<vmem>>, vector<128x1024xbf16>
    %cst_16 = arith.constant dense<0.000000e+00> : vector<8x1024xf32>
    %24 = tpu.matmul %22, %23, %cst_16 {dimension_numbers = #tpu.dot_dimension_numbers<[1], [0], [0], [1], [0, 0, 1, 1], [], []>} : vector<8x128xbf16>, vector<128x1024xbf16>, vector<8x1024xf32> -> vector<8x1024xf32>
    %c0_17 = arith.constant 0 : index
    %c0_18 = arith.constant 0 : index
    %25 = vector.load %arg8[%c0_17, %c0_18] : memref<1x1024xf32, #tpu.memory_space<vmem>>, vector<1x1024xf32>
    %26 = vector.broadcast %25 : vector<1x1024xf32> to vector<8x1024xf32>
    %27 = arith.addf %24, %26 : vector<8x1024xf32>
    %c0_19 = arith.constant 0 : index
    %c0_20 = arith.constant 0 : index
    %28 = vector.load %arg9[%c0_19, %c0_20] : memref<8x1024xf32, #tpu.memory_space<vmem>>, vector<8x1024xf32>
    tpu.vector_store %arg9[%c0_19, %c0_20], %27 {strides = array<i32>} : memref<8x1024xf32, #tpu.memory_space<vmem>>, vector<8x1024xf32>,
    %c0_21 = arith.constant 0 : index
    %c0_22 = arith.constant 0 : index
    %29 = vector.load %arg10[%c0_21, %c0_22] : memref<8x128xf32, #tpu.memory_space<vmem>>, vector<8x128xf32>
    tpu.vector_store %arg10[%c0_21, %c0_22], %15 {strides = array<i32>} : memref<8x128xf32, #tpu.memory_space<vmem>>, vector<8x128xf32>,
    %c0_23 = arith.constant 0 : index
    %c0_24 = arith.constant 0 : index
    %30 = vector.load %arg11[%c0_23, %c0_24] : memref<8x128xf32, #tpu.memory_space<vmem>>, vector<8x128xf32>
    tpu.vector_store %arg11[%c0_23, %c0_24], %16 {strides = array<i32>} : memref<8x128xf32, #tpu.memory_space<vmem>>, vector<8x128xf32>,
    return
  }
  func.func @transform_0(%arg0: i32) -> (i32, i32) {
    %c0_i32 = arith.constant 0 : i32
    %c0_i32_0 = arith.constant 0 : i32
    return %arg0, %c0_i32 : i32, i32
  }
  func.func @transform_1(%arg0: i32) -> (i32, i32) {
    %c0_i32 = arith.constant 0 : i32
    %c0_i32_0 = arith.constant 0 : i32
    return %arg0, %c0_i32 : i32, i32
  }
  func.func @transform_2(%arg0: i32) -> (i32, i32) {
    %c0_i32 = arith.constant 0 : i32
    %c0_i32_0 = arith.constant 0 : i32
    %c0_i32_1 = arith.constant 0 : i32
    return %c0_i32, %c0_i32_0 : i32, i32
  }
  func.func @transform_3(%arg0: i32) -> (i32, i32) {
    %c0_i32 = arith.constant 0 : i32
    %c0_i32_0 = arith.constant 0 : i32
    %c0_i32_1 = arith.constant 0 : i32
    return %c0_i32, %c0_i32_0 : i32, i32
  }
  func.func @transform_4(%arg0: i32) -> (i32, i32) {
    %c0_i32 = arith.constant 0 : i32
    %c0_i32_0 = arith.constant 0 : i32
    %c0_i32_1 = arith.constant 0 : i32
    return %c0_i32, %c0_i32_0 : i32, i32
  }
  func.func @transform_5(%arg0: i32) -> (i32, i32) {
    %c0_i32 = arith.constant 0 : i32
    %c0_i32_0 = arith.constant 0 : i32
    %c0_i32_1 = arith.constant 0 : i32
    return %c0_i32, %c0_i32_0 : i32, i32
  }
  func.func @transform_6(%arg0: i32) -> (i32, i32) {
    %c0_i32 = arith.constant 0 : i32
    %c0_i32_0 = arith.constant 0 : i32
    %c0_i32_1 = arith.constant 0 : i32
    return %c0_i32, %c0_i32_0 : i32, i32
  }
  func.func @transform_7(%arg0: i32) -> (i32, i32) {
    %c0_i32 = arith.constant 0 : i32
    %c0_i32_0 = arith.constant 0 : i32
    %c0_i32_1 = arith.constant 0 : i32
    return %c0_i32, %c0_i32_0 : i32, i32
  }
  func.func @transform_8(%arg0: i32) -> (i32, i32) {
    %c0_i32 = arith.constant 0 : i32
    %c0_i32_0 = arith.constant 0 : i32
    return %arg0, %c0_i32 : i32, i32
  }
  func.func @transform_9(%arg0: i32) -> (i32, i32) {
    %c0_i32 = arith.constant 0 : i32
    %c0_i32_0 = arith.constant 0 : i32
    return %arg0, %c0_i32 : i32, i32
  }
  func.func @transform_10(%arg0: i32) -> (i32, i32) {
    %c0_i32 = arith.constant 0 : i32
    %c0_i32_0 = arith.constant 0 : i32
    return %arg0, %c0_i32 : i32, i32
  }
}

</mosaic_0001>

<llo_original>
// kernel: tpu_custom_call.1
$region0: #{tpu_custom_call.1}
  #allocation0 [shape = 'u32[]', space=smem, size = 0x4, offset = 0x4, fixed_abs, tag = 'smem constant byte address 0x4 - core index']
  #allocation1 [shape = 'u32[144,128]{1,0:T(1,128)}', space=vmem, size = 0x12000, scoped, tag = 'internal scratch']
  %s0 = inlined_call_operand.hbm [shape: bf16[8,1024], index: 0, kind: input, shape index: {}]
  %s1 = inlined_call_operand.hbm [shape: f32[8,128], index: 1, kind: input, shape index: {}]
  %s2 = inlined_call_operand.hbm [shape: bf16[1024,128], index: 2, kind: input, shape index: {}]
  %s3 = inlined_call_operand.hbm [shape: f32[1,128], index: 3, kind: input, shape index: {}]
  %s4 = inlined_call_operand.hbm [shape: bf16[128,256], index: 4, kind: input, shape index: {}]
  %s5 = inlined_call_operand.hbm [shape: f32[1,256], index: 5, kind: input, shape index: {}]
  %s6 = inlined_call_operand.hbm [shape: bf16[128,1024], index: 6, kind: input, shape index: {}]
  %s7 = inlined_call_operand.hbm [shape: f32[1,1024], index: 7, kind: input, shape index: {}]
  %s8 = inlined_call_operand.hbm [shape: f32[8,1024], index: 8, kind: output, shape index: {0}]
  %s9 = inlined_call_operand.hbm [shape: f32[8,128], index: 9, kind: output, shape index: {1}]
  %s10 = inlined_call_operand.hbm [shape: f32[8,128], index: 10, kind: output, shape index: {2}]
  %11 = xla_tuple %s8, %s9, %s10
  %s12 = sld [smem:[#allocation0]]
  $region90: #{tpu_custom_call.1} parent=0
    _
  %s14 = ssub.s32 1, %s12
  %s15 = scalar_select 0, %s14, %s12
  $region1: #{tpu_custom_call.1} parent=0
    #allocation2 [shape = 'u8[16384]{0}', space=vmem, size = 0x4000, scoped, tag = 'input window, operand 0, single buffered']
    #allocation3 [shape = 's32[1]{0}', space=sflag, size = 0x4, scoped, tag = 'scoped memory for tpu_custom_call.1']
    #allocation4 [shape = 's32[1]{0}', space=sflag, size = 0x4, scoped, tag = 'scoped memory for tpu_custom_call.1']
    #allocation5 [shape = 'u8[4096]{0}', space=vmem, size = 0x1000, scoped, tag = 'input window, operand 1, single buffered']
    #allocation6 [shape = 's32[1]{0}', space=sflag, size = 0x4, scoped, tag = 'scoped memory for tpu_custom_call.1']
    #allocation7 [shape = 'u8[262144]{0}', space=vmem, size = 0x40000, scoped, tag = 'input window, operand 2, single buffered']
    #allocation8 [shape = 'u8[512]{0}', space=vmem, size = 0x400, scoped, tag = 'input window, operand 3, single buffered']
    #allocation9 [shape = 's32[1]{0}', space=sflag, size = 0x4, scoped, tag = 'scoped memory for tpu_custom_call.1']
    #allocation10 [shape = 'u8[65536]{0}', space=vmem, size = 0x10000, scoped, tag = 'input window, operand 4, single buffered']
    #allocation11 [shape = 'u8[1024]{0}', space=vmem, size = 0x400, scoped, tag = 'input window, operand 5, single buffered']
    #allocation12 [shape = 's32[1]{0}', space=sflag, size = 0x4, scoped, tag = 'scoped memory for tpu_custom_call.1']
    #allocation13 [shape = 'u8[262144]{0}', space=vmem, size = 0x40000, scoped, tag = 'input window, operand 6, single buffered']
    #allocation14 [shape = 'u8[4096]{0}', space=vmem, size = 0x1000, scoped, tag = 'input window, operand 7, single buffered']
    #allocation15 [shape = 's32[1]{0}', space=sflag, size = 0x4, scoped, tag = 'scoped memory for tpu_custom_call.1']
    #allocation16 [shape = 'u8[32768]{0}', space=vmem, size = 0x8000, scoped, tag = 'output window, operand 0, single buffered']
    #allocation17 [shape = 'u8[4096]{0}', space=vmem, size = 0x1000, scoped, tag = 'output window, operand 1, single buffered']
    #allocation18 [shape = 's32[1]{0}', space=sflag, size = 0x4, scoped, tag = 'scoped memory for tpu_custom_call.1']
    #allocation19 [shape = 'u8[4096]{0}', space=vmem, size = 0x1000, scoped, tag = 'output window, operand 2, single buffered']
    %16 = vsyncpa [#allocation3], 0
    %17 = vsyncpa [#allocation6], 0
    %18 = vsyncpa [#allocation9], 0
    %19 = vsyncpa [#allocation12], 0
    %20 = vsyncpa [#allocation15], 0
    %21 = vsyncpa [#allocation4], 0
    %22 = vsyncpa [#allocation18], 0
    // Predicated region
    $region2: #{tpu_custom_call.1} parent=1 // pred_check
      _
    $region3: #{tpu_custom_call.1} parent=1 // pred_check_branch
      %24 = sbr.rel (0) target = $region5
    $region4: #{tpu_custom_call.1} parent=1 // pred_region
      %s26 = ssub.s32 512, 512
      %27 = vsyncadd [#allocation3], %s26
      %s29 = sshll.u32 [#allocation2], 4
      %s30 = int_to_ptr.vmem [resolvable:$true] %s29
      %32 = dma.hbm_to_vmem [thread:$0]  %s0, 512, %s30, [#allocation3]
    $region5: #{tpu_custom_call.1} parent=1 // pred_fallthru
      _
    // Predicated region
    $region6: #{tpu_custom_call.1} parent=1 // pred_check
      _
    $region7: #{tpu_custom_call.1} parent=1 // pred_check_branch
      %34 = sbr.rel (0) target = $region9
    $region8: #{tpu_custom_call.1} parent=1 // pred_region
      %s36 = ssub.s32 128, 128
      %37 = vsyncadd [#allocation6], %s36
      %s39 = sshll.u32 [#allocation5], 4
      %s40 = int_to_ptr.vmem [resolvable:$true] %s39
      %42 = dma.hbm_to_vmem [thread:$0]  %s1, 128, %s40, [#allocation6]
    $region9: #{tpu_custom_call.1} parent=1 // pred_fallthru
      _
    // Predicated region
    $region10: #{tpu_custom_call.1} parent=1 // pred_check
      _
    $region11: #{tpu_custom_call.1} parent=1 // pred_check_branch
      %44 = sbr.rel (0) target = $region13
    $region12: #{tpu_custom_call.1} parent=1 // pred_region
      %s46 = ssub.s32 8192, 8192
      %47 = vsyncadd [#allocation6], %s46
      %s48 = sshll.u32 [#allocation7], 4
      %s49 = int_to_ptr.vmem [resolvable:$true] %s48
      %54 = dma.hbm_to_vmem [thread:$0]  %s2, 8192, %s49, [#allocation6], 64, 64, 4
    $region13: #{tpu_custom_call.1} parent=1 // pred_fallthru
      _
    // Predicated region
    $region14: #{tpu_custom_call.1} parent=1 // pred_check
      _
    $region15: #{tpu_custom_call.1} parent=1 // pred_check_branch
      %56 = sbr.rel (0) target = $region17
    $region16: #{tpu_custom_call.1} parent=1 // pred_region
      %s58 = ssub.s32 16, 16
      %59 = vsyncadd [#allocation9], %s58
      %s61 = sshll.u32 [#allocation8], 4
      %s62 = int_to_ptr.vmem [resolvable:$true] %s61
      %64 = dma.hbm_to_vmem [thread:$0]  %s3, 16, %s62, [#allocation9]
    $region17: #{tpu_custom_call.1} parent=1 // pred_fallthru
      _
    // Predicated region
    $region18: #{tpu_custom_call.1} parent=1 // pred_check
      _
    $region19: #{tpu_custom_call.1} parent=1 // pred_check_branch
      %66 = sbr.rel (0) target = $region21
    $region20: #{tpu_custom_call.1} parent=1 // pred_region
      %s68 = ssub.s32 2048, 2048
      %69 = vsyncadd [#allocation9], %s68
      %s70 = sshll.u32 [#allocation10], 4
      %s71 = int_to_ptr.vmem [resolvable:$true] %s70
      %76 = dma.hbm_to_vmem [thread:$0]  %s4, 2048, %s71, [#allocation9], 128, 128, 8
    $region21: #{tpu_custom_call.1} parent=1 // pred_fallthru
      _
    // Predicated region
    $region22: #{tpu_custom_call.1} parent=1 // pred_check
      _
    $region23: #{tpu_custom_call.1} parent=1 // pred_check_branch
      %78 = sbr.rel (0) target = $region25
    $region24: #{tpu_custom_call.1} parent=1 // pred_region
      %s80 = ssub.s32 32, 32
      %81 = vsyncadd [#allocation12], %s80
      %s83 = sshll.u32 [#allocation11], 4
      %s84 = int_to_ptr.vmem [resolvable:$true] %s83
      %86 = dma.hbm_to_vmem [thread:$0]  %s5, 32, %s84, [#allocation12]
    $region25: #{tpu_custom_call.1} parent=1 // pred_fallthru
      _
    // Predicated region
    $region26: #{tpu_custom_call.1} parent=1 // pred_check
      _
    $region27: #{tpu_custom_call.1} parent=1 // pred_check_branch
      %88 = sbr.rel (0) target = $region29
    $region28: #{tpu_custom_call.1} parent=1 // pred_region
      %s90 = ssub.s32 8192, 8192
      %91 = vsyncadd [#allocation12], %s90
      %s92 = sshll.u32 [#allocation13], 4
      %s93 = int_to_ptr.vmem [resolvable:$true] %s92
      %98 = dma.hbm_to_vmem [thread:$0]  %s6, 8192, %s93, [#allocation12], 512, 512, 32
    $region29: #{tpu_custom_call.1} parent=1 // pred_fallthru
      _
    // Predicated region
    $region30: #{tpu_custom_call.1} parent=1 // pred_check
      _
    $region31: #{tpu_custom_call.1} parent=1 // pred_check_branch
      %100 = sbr.rel (0) target = $region33
    $region32: #{tpu_custom_call.1} parent=1 // pred_region
      %s102 = ssub.s32 128, 128
      %103 = vsyncadd [#allocation15], %s102
      %s105 = sshll.u32 [#allocation14], 4
      %s106 = int_to_ptr.vmem [resolvable:$true] %s105
      %108 = dma.hbm_to_vmem [thread:$0]  %s7, 128, %s106, [#allocation15]
    $region33: #{tpu_custom_call.1} parent=1 // pred_fallthru
      _
    // Predicated region
    $region34: #{tpu_custom_call.1} parent=1 // pred_check
      _
    $region35: #{tpu_custom_call.1} parent=1 // pred_check_branch
      %110 = sbr.rel (0) target = $region37
    $region36: #{tpu_custom_call.1} parent=1 // pred_region
      %111 = dma.done [#allocation3], 512
    $region37: #{tpu_custom_call.1} parent=1 // pred_fallthru
      _
    // Predicated region
    $region38: #{tpu_custom_call.1} parent=1 // pred_check
      _
    $region39: #{tpu_custom_call.1} parent=1 // pred_check_branch
      %113 = sbr.rel (0) target = $region41
    $region40: #{tpu_custom_call.1} parent=1 // pred_region
      %114 = dma.done [#allocation6], 128
    $region41: #{tpu_custom_call.1} parent=1 // pred_fallthru
      _
    // Predicated region
    $region42: #{tpu_custom_call.1} parent=1 // pred_check
      _
    $region43: #{tpu_custom_call.1} parent=1 // pred_check_branch
      %116 = sbr.rel (0) target = $region45
    $region44: #{tpu_custom_call.1} parent=1 // pred_region
      %117 = dma.done [#allocation6], 8192
    $region45: #{tpu_custom_call.1} parent=1 // pred_fallthru
      _
    // Predicated region
    $region46: #{tpu_custom_call.1} parent=1 // pred_check
      _
    $region47: #{tpu_custom_call.1} parent=1 // pred_check_branch
      %119 = sbr.rel (0) target = $region49
    $region48: #{tpu_custom_call.1} parent=1 // pred_region
      %120 = dma.done [#allocation9], 16
    $region49: #{tpu_custom_call.1} parent=1 // pred_fallthru
      _
    // Predicated region
    $region50: #{tpu_custom_call.1} parent=1 // pred_check
      _
    $region51: #{tpu_custom_call.1} parent=1 // pred_check_branch
      %122 = sbr.rel (0) target = $region53
    $region52: #{tpu_custom_call.1} parent=1 // pred_region
      %123 = dma.done [#allocation9], 2048
    $region53: #{tpu_custom_call.1} parent=1 // pred_fallthru
      _
    // Predicated region
    $region54: #{tpu_custom_call.1} parent=1 // pred_check
      _
    $region55: #{tpu_custom_call.1} parent=1 // pred_check_branch
      %125 = sbr.rel (0) target = $region57
    $region56: #{tpu_custom_call.1} parent=1 // pred_region
      %126 = dma.done [#allocation12], 32
    $region57: #{tpu_custom_call.1} parent=1 // pred_fallthru
      _
    // Predicated region
    $region58: #{tpu_custom_call.1} parent=1 // pred_check
      _
    $region59: #{tpu_custom_call.1} parent=1 // pred_check_branch
      %128 = sbr.rel (0) target = $region61
    $region60: #{tpu_custom_call.1} parent=1 // pred_region
      %129 = dma.done [#allocation12], 8192
    $region61: #{tpu_custom_call.1} parent=1 // pred_fallthru
      _
    // Predicated region
    $region62: #{tpu_custom_call.1} parent=1 // pred_check
      _
    $region63: #{tpu_custom_call.1} parent=1 // pred_check_branch
      %131 = sbr.rel (0) target = $region65
    $region64: #{tpu_custom_call.1} parent=1 // pred_region
      %132 = dma.done [#allocation15], 128
    $region65: #{tpu_custom_call.1} parent=1 // pred_fallthru
      _
    %v134 = vld [vmem:[#allocation2] sm:$0xff]
    %v135 = vld [vmem:[#allocation2 + $0x8] sm:$0xff]
    %v136 = vld [vmem:[#allocation2 + $0x10] sm:$0xff]
    %v137 = vld [vmem:[#allocation2 + $0x18] sm:$0xff]
    %v138 = vld [vmem:[#allocation5] sm:$0xff]
    %v139 = vld [vmem:[#allocation7] sm:$0xf]
    %v140 = vld [vmem:[#allocation7 + $0x4] sm:$0xf]
    %v141 = vld [vmem:[#allocation7 + $0x8] sm:$0xf]
    %v142 = vld [vmem:[#allocation7 + $0xc] sm:$0xf]
    %v143 = vld [vmem:[#allocation7 + $0x10] sm:$0xf]
    %v144 = vld [vmem:[#allocation7 + $0x14] sm:$0xf]
    %v145 = vld [vmem:[#allocation7 + $0x18] sm:$0xf]
    %v146 = vld [vmem:[#allocation7 + $0x1c] sm:$0xf]
    %v147 = vld [vmem:[#allocation7 + $0x20] sm:$0xf]
    %v148 = vld [vmem:[#allocation7 + $0x24] sm:$0xf]
    %v149 = vld [vmem:[#allocation7 + $0x28] sm:$0xf]
    %v150 = vld [vmem:[#allocation7 + $0x2c] sm:$0xf]
    %v151 = vld [vmem:[#allocation7 + $0x30] sm:$0xf]
    %v152 = vld [vmem:[#allocation7 + $0x34] sm:$0xf]
    %v153 = vld [vmem:[#allocation7 + $0x38] sm:$0xf]
    %v154 = vld [vmem:[#allocation7 + $0x3c] sm:$0xf]
    %v155 = vld [vmem:[#allocation7 + $0x40] sm:$0xf]
    %v156 = vld [vmem:[#allocation7 + $0x44] sm:$0xf]
    %v157 = vld [vmem:[#allocation7 + $0x48] sm:$0xf]
    %v158 = vld [vmem:[#allocation7 + $0x4c] sm:$0xf]
    %v159 = vld [vmem:[#allocation7 + $0x50] sm:$0xf]
    %v160 = vld [vmem:[#allocation7 + $0x54] sm:$0xf]
    %v161 = vld [vmem:[#allocation7 + $0x58] sm:$0xf]
    %v162 = vld [vmem:[#allocation7 + $0x5c] sm:$0xf]
    %v163 = vld [vmem:[#allocation7 + $0x60] sm:$0xf]
    %v164 = vld [vmem:[#allocation7 + $0x64] sm:$0xf]
    %v165 = vld [vmem:[#allocation7 + $0x68] sm:$0xf]
    %v166 = vld [vmem:[#allocation7 + $0x6c] sm:$0xf]
    %v167 = vld [vmem:[#allocation7 + $0x70] sm:$0xf]
    %v168 = vld [vmem:[#allocation7 + $0x74] sm:$0xf]
    %v169 = vld [vmem:[#allocation7 + $0x78] sm:$0xf]
    %v170 = vld [vmem:[#allocation7 + $0x7c] sm:$0xf]
    %v171 = vld [vmem:[#allocation7 + $0x80] sm:$0xf]
    %v172 = vld [vmem:[#allocation7 + $0x84] sm:$0xf]
    %v173 = vld [vmem:[#allocation7 + $0x88] sm:$0xf]
    %v174 = vld [vmem:[#allocation7 + $0x8c] sm:$0xf]
    %v175 = vld [vmem:[#allocation7 + $0x90] sm:$0xf]
    %v176 = vld [vmem:[#allocation7 + $0x94] sm:$0xf]
    %v177 = vld [vmem:[#allocation7 + $0x98] sm:$0xf]
    %v178 = vld [vmem:[#allocation7 + $0x9c] sm:$0xf]
    %v179 = vld [vmem:[#allocation7 + $0xa0] sm:$0xf]
    %v180 = vld [vmem:[#allocation7 + $0xa4] sm:$0xf]
    %v181 = vld [vmem:[#allocation7 + $0xa8] sm:$0xf]
    %v182 = vld [vmem:[#allocation7 + $0xac] sm:$0xf]
    %v183 = vld [vmem:[#allocation7 + $0xb0] sm:$0xf]
    %v184 = vld [vmem:[#allocation7 + $0xb4] sm:$0xf]
    %v185 = vld [vmem:[#allocation7 + $0xb8] sm:$0xf]
    %v186 = vld [vmem:[#allocation7 + $0xbc] sm:$0xf]
    %v187 = vld [vmem:[#allocation7 + $0xc0] sm:$0xf]
    %v188 = vld [vmem:[#allocation7 + $0xc4] sm:$0xf]
    %v189 = vld [vmem:[#allocation7 + $0xc8] sm:$0xf]
    %v190 = vld [vmem:[#allocation7 + $0xcc] sm:$0xf]
    %v191 = vld [vmem:[#allocation7 + $0xd0] sm:$0xf]
    %v192 = vld [vmem:[#allocation7 + $0xd4] sm:$0xf]
    %v193 = vld [vmem:[#allocation7 + $0xd8] sm:$0xf]
    %v194 = vld [vmem:[#allocation7 + $0xdc] sm:$0xf]
    %v195 = vld [vmem:[#allocation7 + $0xe0] sm:$0xf]
    %v196 = vld [vmem:[#allocation7 + $0xe4] sm:$0xf]
    %v197 = vld [vmem:[#allocation7 + $0xe8] sm:$0xf]
    %v198 = vld [vmem:[#allocation7 + $0xec] sm:$0xf]
    %v199 = vld [vmem:[#allocation7 + $0xf0] sm:$0xf]
    %v200 = vld [vmem:[#allocation7 + $0xf4] sm:$0xf]
    %v201 = vld [vmem:[#allocation7 + $0xf8] sm:$0xf]
    %v202 = vld [vmem:[#allocation7 + $0xfc] sm:$0xf]
    %v203 = vld [vmem:[#allocation7 + $0x100] sm:$0xf]
    %v204 = vld [vmem:[#allocation7 + $0x104] sm:$0xf]
    %v205 = vld [vmem:[#allocation7 + $0x108] sm:$0xf]
    %v206 = vld [vmem:[#allocation7 + $0x10c] sm:$0xf]
    %v207 = vld [vmem:[#allocation7 + $0x110] sm:$0xf]
    %v208 = vld [vmem:[#allocation7 + $0x114] sm:$0xf]
    %v209 = vld [vmem:[#allocation7 + $0x118] sm:$0xf]
    %v210 = vld [vmem:[#allocation7 + $0x11c] sm:$0xf]
    %v211 = vld [vmem:[#allocation7 + $0x120] sm:$0xf]
    %v212 = vld [vmem:[#allocation7 + $0x124] sm:$0xf]
    %v213 = vld [vmem:[#allocation7 + $0x128] sm:$0xf]
    %v214 = vld [vmem:[#allocation7 + $0x12c] sm:$0xf]
    %v215 = vld [vmem:[#allocation7 + $0x130] sm:$0xf]
    %v216 = vld [vmem:[#allocation7 + $0x134] sm:$0xf]
    %v217 = vld [vmem:[#allocation7 + $0x138] sm:$0xf]
    %v218 = vld [vmem:[#allocation7 + $0x13c] sm:$0xf]
    %v219 = vld [vmem:[#allocation7 + $0x140] sm:$0xf]
    %v220 = vld [vmem:[#allocation7 + $0x144] sm:$0xf]
    %v221 = vld [vmem:[#allocation7 + $0x148] sm:$0xf]
    %v222 = vld [vmem:[#allocation7 + $0x14c] sm:$0xf]
    %v223 = vld [vmem:[#allocation7 + $0x150] sm:$0xf]
    %v224 = vld [vmem:[#allocation7 + $0x154] sm:$0xf]
    %v225 = vld [vmem:[#allocation7 + $0x158] sm:$0xf]
    %v226 = vld [vmem:[#allocation7 + $0x15c] sm:$0xf]
    %v227 = vld [vmem:[#allocation7 + $0x160] sm:$0xf]
    %v228 = vld [vmem:[#allocation7 + $0x164] sm:$0xf]
    %v229 = vld [vmem:[#allocation7 + $0x168] sm:$0xf]
    %v230 = vld [vmem:[#allocation7 + $0x16c] sm:$0xf]
    %v231 = vld [vmem:[#allocation7 + $0x170] sm:$0xf]
    %v232 = vld [vmem:[#allocation7 + $0x174] sm:$0xf]
    %v233 = vld [vmem:[#allocation7 + $0x178] sm:$0xf]
    %v234 = vld [vmem:[#allocation7 + $0x17c] sm:$0xf]
    %v235 = vld [vmem:[#allocation7 + $0x180] sm:$0xf]
    %v236 = vld [vmem:[#allocation7 + $0x184] sm:$0xf]
    %v237 = vld [vmem:[#allocation7 + $0x188] sm:$0xf]
    %v238 = vld [vmem:[#allocation7 + $0x18c] sm:$0xf]
    %v239 = vld [vmem:[#allocation7 + $0x190] sm:$0xf]
    %v240 = vld [vmem:[#allocation7 + $0x194] sm:$0xf]
    %v241 = vld [vmem:[#allocation7 + $0x198] sm:$0xf]
    %v242 = vld [vmem:[#allocation7 + $0x19c] sm:$0xf]
    %v243 = vld [vmem:[#allocation7 + $0x1a0] sm:$0xf]
    %v244 = vld [vmem:[#allocation7 + $0x1a4] sm:$0xf]
    %v245 = vld [vmem:[#allocation7 + $0x1a8] sm:$0xf]
    %v246 = vld [vmem:[#allocation7 + $0x1ac] sm:$0xf]
    %v247 = vld [vmem:[#allocation7 + $0x1b0] sm:$0xf]
    %v248 = vld [vmem:[#allocation7 + $0x1b4] sm:$0xf]
    %v249 = vld [vmem:[#allocation7 + $0x1b8] sm:$0xf]
    %v250 = vld [vmem:[#allocation7 + $0x1bc] sm:$0xf]
    %v251 = vld [vmem:[#allocation7 + $0x1c0] sm:$0xf]
    %v252 = vld [vmem:[#allocation7 + $0x1c4] sm:$0xf]
    %v253 = vld [vmem:[#allocation7 + $0x1c8] sm:$0xf]
    %v254 = vld [vmem:[#allocation7 + $0x1cc] sm:$0xf]
    %v255 = vld [vmem:[#allocation7 + $0x1d0] sm:$0xf]
    %v256 = vld [vmem:[#allocation7 + $0x1d4] sm:$0xf]
    %v257 = vld [vmem:[#allocation7 + $0x1d8] sm:$0xf]
    %v258 = vld [vmem:[#allocation7 + $0x1dc] sm:$0xf]
    %v259 = vld [vmem:[#allocation7 + $0x1e0] sm:$0xf]
    %v260 = vld [vmem:[#allocation7 + $0x1e4] sm:$0xf]
    %v261 = vld [vmem:[#allocation7 + $0x1e8] sm:$0xf]
    %v262 = vld [vmem:[#allocation7 + $0x1ec] sm:$0xf]
    %v263 = vld [vmem:[#allocation7 + $0x1f0] sm:$0xf]
    %v264 = vld [vmem:[#allocation7 + $0x1f4] sm:$0xf]
    %v265 = vld [vmem:[#allocation7 + $0x1f8] sm:$0xf]
    %v266 = vld [vmem:[#allocation7 + $0x1fc] sm:$0xf]
    %v267 = vld [vmem:[#allocation8] sm:$0x1]
    %v269 = vlaneseq
    %v270 = vshrl.u32 %v269, 7
    %v271 = vsub.s32 0, %v270
    %v272 = vrot.slane %v267, %v271
    %v278 = vunpack.c.l.b16 %v134
    %v279 = vunpack.c.h.b16 %v134
    %v280 = vunpack.c.l.b16 %v135
    %v281 = vunpack.c.h.b16 %v135
    %v282 = vunpack.c.l.b16 %v136
    %v283 = vunpack.c.h.b16 %v136
    %v284 = vunpack.c.l.b16 %v137
    %v285 = vunpack.c.h.b16 %v137
    %v286 = vpack.c.b16 %v278, %v278
    %v287 = vpack.c.b16 %v279, %v279
    %v288 = vpack.c.b16 %v280, %v280
    %v289 = vpack.c.b16 %v281, %v281
    %v290 = vpack.c.b16 %v282, %v282
    %v291 = vpack.c.b16 %v283, %v283
    %v292 = vpack.c.b16 %v284, %v284
    %v293 = vpack.c.b16 %v285, %v285
    %v430 = vunpack.c.l.b16 %v139
    %v431 = vunpack.c.l.b16 %v140
    %v432 = vunpack.c.l.b16 %v141
    %v433 = vunpack.c.l.b16 %v142
    %v434 = vunpack.c.l.b16 %v143
    %v435 = vunpack.c.l.b16 %v144
    %v436 = vunpack.c.l.b16 %v145
    %v437 = vunpack.c.l.b16 %v146
    %v438 = vunpack.c.l.b16 %v147
    %v439 = vunpack.c.l.b16 %v148
    %v440 = vunpack.c.l.b16 %v149
    %v441 = vunpack.c.l.b16 %v150
    %v442 = vunpack.c.l.b16 %v151
    %v443 = vunpack.c.l.b16 %v152
    %v444 = vunpack.c.l.b16 %v153
    %v445 = vunpack.c.l.b16 %v154
    %v446 = vunpack.c.l.b16 %v155
    %v447 = vunpack.c.l.b16 %v156
    %v448 = vunpack.c.l.b16 %v157
    %v449 = vunpack.c.l.b16 %v158
    %v450 = vunpack.c.l.b16 %v159
    %v451 = vunpack.c.l.b16 %v160
    %v452 = vunpack.c.l.b16 %v161
    %v453 = vunpack.c.l.b16 %v162
    %v454 = vunpack.c.l.b16 %v163
    %v455 = vunpack.c.l.b16 %v164
    %v456 = vunpack.c.l.b16 %v165
    %v457 = vunpack.c.l.b16 %v166
    %v458 = vunpack.c.l.b16 %v167
    %v459 = vunpack.c.l.b16 %v168
    %v460 = vunpack.c.l.b16 %v169
    %v461 = vunpack.c.l.b16 %v170
    %v462 = vunpack.c.l.b16 %v171
    %v463 = vunpack.c.l.b16 %v172
    %v464 = vunpack.c.l.b16 %v173
    %v465 = vunpack.c.l.b16 %v174
    %v466 = vunpack.c.l.b16 %v175
    %v467 = vunpack.c.l.b16 %v176
    %v468 = vunpack.c.l.b16 %v177
    %v469 = vunpack.c.l.b16 %v178
    %v470 = vunpack.c.l.b16 %v179
    %v471 = vunpack.c.l.b16 %v180
    %v472 = vunpack.c.l.b16 %v181
    %v473 = vunpack.c.l.b16 %v182
    %v474 = vunpack.c.l.b16 %v183
    %v475 = vunpack.c.l.b16 %v184
    %v476 = vunpack.c.l.b16 %v185
    %v477 = vunpack.c.l.b16 %v186
    %v478 = vunpack.c.l.b16 %v187
    %v479 = vunpack.c.l.b16 %v188
    %v480 = vunpack.c.l.b16 %v189
    %v481 = vunpack.c.l.b16 %v190
    %v482 = vunpack.c.l.b16 %v191
    %v483 = vunpack.c.l.b16 %v192
    %v484 = vunpack.c.l.b16 %v193
    %v485 = vunpack.c.l.b16 %v194
    %v486 = vunpack.c.l.b16 %v195
    %v487 = vunpack.c.l.b16 %v196
    %v488 = vunpack.c.l.b16 %v197
    %v489 = vunpack.c.l.b16 %v198
    %v490 = vunpack.c.l.b16 %v199
    %v491 = vunpack.c.l.b16 %v200
    %v492 = vunpack.c.l.b16 %v201
    %v493 = vunpack.c.l.b16 %v202
    %v494 = vunpack.c.l.b16 %v203
    %v495 = vunpack.c.l.b16 %v204
    %v496 = vunpack.c.l.b16 %v205
    %v497 = vunpack.c.l.b16 %v206
    %v498 = vunpack.c.l.b16 %v207
    %v499 = vunpack.c.l.b16 %v208
    %v500 = vunpack.c.l.b16 %v209
    %v501 = vunpack.c.l.b16 %v210
    %v502 = vunpack.c.l.b16 %v211
    %v503 = vunpack.c.l.b16 %v212
    %v504 = vunpack.c.l.b16 %v213
    %v505 = vunpack.c.l.b16 %v214
    %v506 = vunpack.c.l.b16 %v215
    %v507 = vunpack.c.l.b16 %v216
    %v508 = vunpack.c.l.b16 %v217
    %v509 = vunpack.c.l.b16 %v218
    %v510 = vunpack.c.l.b16 %v219
    %v511 = vunpack.c.l.b16 %v220
    %v512 = vunpack.c.l.b16 %v221
    %v513 = vunpack.c.l.b16 %v222
    %v514 = vunpack.c.l.b16 %v223
    %v515 = vunpack.c.l.b16 %v224
    %v516 = vunpack.c.l.b16 %v225
    %v517 = vunpack.c.l.b16 %v226
    %v518 = vunpack.c.l.b16 %v227
    %v519 = vunpack.c.l.b16 %v228
    %v520 = vunpack.c.l.b16 %v229
    %v521 = vunpack.c.l.b16 %v230
    %v522 = vunpack.c.l.b16 %v231
    %v523 = vunpack.c.l.b16 %v232
    %v524 = vunpack.c.l.b16 %v233
    %v525 = vunpack.c.l.b16 %v234
    %v526 = vunpack.c.l.b16 %v235
    %v527 = vunpack.c.l.b16 %v236
    %v528 = vunpack.c.l.b16 %v237
    %v529 = vunpack.c.l.b16 %v238
    %v530 = vunpack.c.l.b16 %v239
    %v531 = vunpack.c.l.b16 %v240
    %v532 = vunpack.c.l.b16 %v241
    %v533 = vunpack.c.l.b16 %v242
    %v534 = vunpack.c.l.b16 %v243
    %v535 = vunpack.c.l.b16 %v244
    %v536 = vunpack.c.l.b16 %v245
    %v537 = vunpack.c.l.b16 %v246
    %v538 = vunpack.c.l.b16 %v247
    %v539 = vunpack.c.l.b16 %v248
    %v540 = vunpack.c.l.b16 %v249
    %v541 = vunpack.c.l.b16 %v250
    %v542 = vunpack.c.l.b16 %v251
    %v543 = vunpack.c.l.b16 %v252
    %v544 = vunpack.c.l.b16 %v253
    %v545 = vunpack.c.l.b16 %v254
    %v546 = vunpack.c.l.b16 %v255
    %v547 = vunpack.c.l.b16 %v256
    %v548 = vunpack.c.l.b16 %v257
    %v549 = vunpack.c.l.b16 %v258
    %v550 = vunpack.c.l.b16 %v259
    %v551 = vunpack.c.l.b16 %v260
    %v552 = vunpack.c.l.b16 %v261
    %v553 = vunpack.c.l.b16 %v262
    %v554 = vunpack.c.l.b16 %v263
    %v555 = vunpack.c.l.b16 %v264
    %v556 = vunpack.c.l.b16 %v265
    %v557 = vunpack.c.l.b16 %v266
    %v558 = vpack.c.b16 %v431, %v430
    %v559 = vpack.c.b16 %v433, %v432
    %v560 = vpack.c.b16 %v435, %v434
    %v561 = vpack.c.b16 %v437, %v436
    %v562 = vpack.c.b16 %v439, %v438
    %v563 = vpack.c.b16 %v441, %v440
    %v564 = vpack.c.b16 %v443, %v442
    %v565 = vpack.c.b16 %v445, %v444
    %v566 = vpack.c.b16 %v447, %v446
    %v567 = vpack.c.b16 %v449, %v448
    %v568 = vpack.c.b16 %v451, %v450
    %v569 = vpack.c.b16 %v453, %v452
    %v570 = vpack.c.b16 %v455, %v454
    %v571 = vpack.c.b16 %v457, %v456
    %v572 = vpack.c.b16 %v459, %v458
    %v573 = vpack.c.b16 %v461, %v460
    %v574 = vpack.c.b16 %v463, %v462
    %v575 = vpack.c.b16 %v465, %v464
    %v576 = vpack.c.b16 %v467, %v466
    %v577 = vpack.c.b16 %v469, %v468
    %v578 = vpack.c.b16 %v471, %v470
    %v579 = vpack.c.b16 %v473, %v472
    %v580 = vpack.c.b16 %v475, %v474
    %v581 = vpack.c.b16 %v477, %v476
    %v582 = vpack.c.b16 %v479, %v478
    %v583 = vpack.c.b16 %v481, %v480
    %v584 = vpack.c.b16 %v483, %v482
    %v585 = vpack.c.b16 %v485, %v484
    %v586 = vpack.c.b16 %v487, %v486
    %v587 = vpack.c.b16 %v489, %v488
    %v588 = vpack.c.b16 %v491, %v490
    %v589 = vpack.c.b16 %v493, %v492
    %v590 = vpack.c.b16 %v495, %v494
    %v591 = vpack.c.b16 %v497, %v496
    %v592 = vpack.c.b16 %v499, %v498
    %v593 = vpack.c.b16 %v501, %v500
    %v594 = vpack.c.b16 %v503, %v502
    %v595 = vpack.c.b16 %v505, %v504
    %v596 = vpack.c.b16 %v507, %v506
    %v597 = vpack.c.b16 %v509, %v508
    %v598 = vpack.c.b16 %v511, %v510
    %v599 = vpack.c.b16 %v513, %v512
    %v600 = vpack.c.b16 %v515, %v514
    %v601 = vpack.c.b16 %v517, %v516
    %v602 = vpack.c.b16 %v519, %v518
    %v603 = vpack.c.b16 %v521, %v520
    %v604 = vpack.c.b16 %v523, %v522
    %v605 = vpack.c.b16 %v525, %v524
    %v606 = vpack.c.b16 %v527, %v526
    %v607 = vpack.c.b16 %v529, %v528
    %v608 = vpack.c.b16 %v531, %v530
    %v609 = vpack.c.b16 %v533, %v532
    %v610 = vpack.c.b16 %v535, %v534
    %v611 = vpack.c.b16 %v537, %v536
    %v612 = vpack.c.b16 %v539, %v538
    %v613 = vpack.c.b16 %v541, %v540
    %v614 = vpack.c.b16 %v543, %v542
    %v615 = vpack.c.b16 %v545, %v544
    %v616 = vpack.c.b16 %v547, %v546
    %v617 = vpack.c.b16 %v549, %v548
    %v618 = vpack.c.b16 %v551, %v550
    %v619 = vpack.c.b16 %v553, %v552
    %v620 = vpack.c.b16 %v555, %v554
    %v621 = vpack.c.b16 %v557, %v556
    %686 = vmatprep.subr.bf16.mxu0 0
    %687 = vmatpush1.bf16.msra.mxu0 %v558
    %688 = vmatprep.subr.bf16.mxu0 0
    %689 = vmatpush1.bf16.msra.mxu0 %v559
    %690 = vmatprep.subr.bf16.mxu0 0
    %691 = vmatpush1.bf16.msra.mxu0 %v560
    %692 = vmatprep.subr.bf16.mxu0 0
    %693 = vmatpush1.bf16.msra.mxu0 %v561
    %694 = vmatprep.subr.bf16.mxu0 0
    %695 = vmatpush1.bf16.msra.mxu0 %v562
    %696 = vmatprep.subr.bf16.mxu0 0
    %697 = vmatpush1.bf16.msra.mxu0 %v563
    %698 = vmatprep.subr.bf16.mxu0 0
    %699 = vmatpush1.bf16.msra.mxu0 %v564
    %700 = vmatprep.subr.bf16.mxu0 0
    %701 = vmatpush1.bf16.msra.mxu0 %v565
    %702 = vmatprep.subr.bf16.mxu0 0
    %703 = vmatpush1.bf16.msra.mxu0 %v566
    %704 = vmatprep.subr.bf16.mxu0 0
    %705 = vmatpush1.bf16.msra.mxu0 %v567
    %706 = vmatprep.subr.bf16.mxu0 0
    %707 = vmatpush1.bf16.msra.mxu0 %v568
    %708 = vmatprep.subr.bf16.mxu0 0
    %709 = vmatpush1.bf16.msra.mxu0 %v569
    %710 = vmatprep.subr.bf16.mxu0 0
    %711 = vmatpush1.bf16.msra.mxu0 %v570
    %712 = vmatprep.subr.bf16.mxu0 0
    %713 = vmatpush1.bf16.msra.mxu0 %v571
    %714 = vmatprep.subr.bf16.mxu0 0
    %715 = vmatpush1.bf16.msra.mxu0 %v572
    %716 = vmatprep.subr.bf16.mxu0 0
    %717 = vmatpush1.bf16.msra.mxu0 %v573
    %718 = vmatprep.mubr.bf16.mxu0 %v287
    %719 = vmatmul.mubr.bf16.gmra.mrb[0].mxu0 %v286
    %v720 = vpop.f32.mrb[0].mxu0
    %v721 = vadd.f32 %v272, %v720
    %v722 = vpop.f32.mrb[0].mxu0
    %v723 = vpop.f32.mrb[0].mxu0
    %v724 = vpop.f32.mrb[0].mxu0
    %725 = vdwg.mxu0
    %726 = vmatprep.subr.bf16.mxu0 0
    %727 = vmatpush1.bf16.msra.mxu0 %v574
    %728 = vmatprep.subr.bf16.mxu0 0
    %729 = vmatpush1.bf16.msra.mxu0 %v575
    %730 = vmatprep.subr.bf16.mxu0 0
    %731 = vmatpush1.bf16.msra.mxu0 %v576
    %732 = vmatprep.subr.bf16.mxu0 0
    %733 = vmatpush1.bf16.msra.mxu0 %v577
    %734 = vmatprep.subr.bf16.mxu0 0
    %735 = vmatpush1.bf16.msra.mxu0 %v578
    %736 = vmatprep.subr.bf16.mxu0 0
    %737 = vmatpush1.bf16.msra.mxu0 %v579
    %738 = vmatprep.subr.bf16.mxu0 0
    %739 = vmatpush1.bf16.msra.mxu0 %v580
    %740 = vmatprep.subr.bf16.mxu0 0
    %741 = vmatpush1.bf16.msra.mxu0 %v581
    %742 = vmatprep.subr.bf16.mxu0 0
    %743 = vmatpush1.bf16.msra.mxu0 %v582
    %744 = vmatprep.subr.bf16.mxu0 0
    %745 = vmatpush1.bf16.msra.mxu0 %v583
    %746 = vmatprep.subr.bf16.mxu0 0
    %747 = vmatpush1.bf16.msra.mxu0 %v584
    %748 = vmatprep.subr.bf16.mxu0 0
    %749 = vmatpush1.bf16.msra.mxu0 %v585
    %750 = vmatprep.subr.bf16.mxu0 0
    %751 = vmatpush1.bf16.msra.mxu0 %v586
    %752 = vmatprep.subr.bf16.mxu0 0
    %753 = vmatpush1.bf16.msra.mxu0 %v587
    %754 = vmatprep.subr.bf16.mxu0 0
    %755 = vmatpush1.bf16.msra.mxu0 %v588
    %756 = vmatprep.subr.bf16.mxu0 0
    %757 = vmatpush1.bf16.msra.mxu0 %v589
    %758 = vmatprep.mubr.bf16.mxu0 %v289
    %759 = vmatmul.mubr.bf16.gmra.mrb[0].mxu0 %v288
    %v760 = vpop.f32.mrb[0].mxu0
    %v761 = vadd.f32 %v721, %v760
    %v762 = vpop.f32.mrb[0].mxu0
    %v763 = vpop.f32.mrb[0].mxu0
    %v764 = vpop.f32.mrb[0].mxu0
    %765 = vdwg.mxu0
    %766 = vmatprep.subr.bf16.mxu0 0
    %767 = vmatpush1.bf16.msra.mxu0 %v590
    %768 = vmatprep.subr.bf16.mxu0 0
    %769 = vmatpush1.bf16.msra.mxu0 %v591
    %770 = vmatprep.subr.bf16.mxu0 0
    %771 = vmatpush1.bf16.msra.mxu0 %v592
    %772 = vmatprep.subr.bf16.mxu0 0
    %773 = vmatpush1.bf16.msra.mxu0 %v593
    %774 = vmatprep.subr.bf16.mxu0 0
    %775 = vmatpush1.bf16.msra.mxu0 %v594
    %776 = vmatprep.subr.bf16.mxu0 0
    %777 = vmatpush1.bf16.msra.mxu0 %v595
    %778 = vmatprep.subr.bf16.mxu0 0
    %779 = vmatpush1.bf16.msra.mxu0 %v596
    %780 = vmatprep.subr.bf16.mxu0 0
    %781 = vmatpush1.bf16.msra.mxu0 %v597
    %782 = vmatprep.subr.bf16.mxu0 0
    %783 = vmatpush1.bf16.msra.mxu0 %v598
    %784 = vmatprep.subr.bf16.mxu0 0
    %785 = vmatpush1.bf16.msra.mxu0 %v599
    %786 = vmatprep.subr.bf16.mxu0 0
    %787 = vmatpush1.bf16.msra.mxu0 %v600
    %788 = vmatprep.subr.bf16.mxu0 0
    %789 = vmatpush1.bf16.msra.mxu0 %v601
    %790 = vmatprep.subr.bf16.mxu0 0
    %791 = vmatpush1.bf16.msra.mxu0 %v602
    %792 = vmatprep.subr.bf16.mxu0 0
    %793 = vmatpush1.bf16.msra.mxu0 %v603
    %794 = vmatprep.subr.bf16.mxu0 0
    %795 = vmatpush1.bf16.msra.mxu0 %v604
    %796 = vmatprep.subr.bf16.mxu0 0
    %797 = vmatpush1.bf16.msra.mxu0 %v605
    %798 = vmatprep.mubr.bf16.mxu0 %v291
    %799 = vmatmul.mubr.bf16.gmra.mrb[0].mxu0 %v290
    %v800 = vpop.f32.mrb[0].mxu0
    %v801 = vadd.f32 %v761, %v800
    %v802 = vpop.f32.mrb[0].mxu0
    %v803 = vpop.f32.mrb[0].mxu0
    %v804 = vpop.f32.mrb[0].mxu0
    %805 = vdwg.mxu0
    %806 = vmatprep.subr.bf16.mxu0 0
    %807 = vmatpush1.bf16.msra.mxu0 %v606
    %808 = vmatprep.subr.bf16.mxu0 0
    %809 = vmatpush1.bf16.msra.mxu0 %v607
    %810 = vmatprep.subr.bf16.mxu0 0
    %811 = vmatpush1.bf16.msra.mxu0 %v608
    %812 = vmatprep.subr.bf16.mxu0 0
    %813 = vmatpush1.bf16.msra.mxu0 %v609
    %814 = vmatprep.subr.bf16.mxu0 0
    %815 = vmatpush1.bf16.msra.mxu0 %v610
    %816 = vmatprep.subr.bf16.mxu0 0
    %817 = vmatpush1.bf16.msra.mxu0 %v611
    %818 = vmatprep.subr.bf16.mxu0 0
    %819 = vmatpush1.bf16.msra.mxu0 %v612
    %820 = vmatprep.subr.bf16.mxu0 0
    %821 = vmatpush1.bf16.msra.mxu0 %v613
    %822 = vmatprep.subr.bf16.mxu0 0
    %823 = vmatpush1.bf16.msra.mxu0 %v614
    %824 = vmatprep.subr.bf16.mxu0 0
    %825 = vmatpush1.bf16.msra.mxu0 %v615
    %826 = vmatprep.subr.bf16.mxu0 0
    %827 = vmatpush1.bf16.msra.mxu0 %v616
    %828 = vmatprep.subr.bf16.mxu0 0
    %829 = vmatpush1.bf16.msra.mxu0 %v617
    %830 = vmatprep.subr.bf16.mxu0 0
    %831 = vmatpush1.bf16.msra.mxu0 %v618
    %832 = vmatprep.subr.bf16.mxu0 0
    %833 = vmatpush1.bf16.msra.mxu0 %v619
    %834 = vmatprep.subr.bf16.mxu0 0
    %835 = vmatpush1.bf16.msra.mxu0 %v620
    %836 = vmatprep.subr.bf16.mxu0 0
    %837 = vmatpush1.bf16.msra.mxu0 %v621
    %838 = vmatprep.mubr.bf16.mxu0 %v293
    %839 = vmatmul.mubr.bf16.gmra.mrb[0].mxu0 %v292
    %v840 = vpop.f32.mrb[0].mxu0
    %v841 = vadd.f32 %v801, %v840
    %v842 = vpop.f32.mrb[0].mxu0
    %v843 = vpop.f32.mrb[0].mxu0
    %v844 = vpop.f32.mrb[0].mxu0
    %845 = vdwg.mxu0
    %v846 = vmax.f32 %v841, 0.0
    %v847 = vpack.c.bf16 %v846, %v846
    %v848 = vld [vmem:[#allocation10] sm:$0xff]
    %v849 = vld [vmem:[#allocation10 + $0x8] sm:$0xff]
    %v850 = vld [vmem:[#allocation10 + $0x10] sm:$0xff]
    %v851 = vld [vmem:[#allocation10 + $0x18] sm:$0xff]
    %v852 = vld [vmem:[#allocation10 + $0x20] sm:$0xff]
    %v853 = vld [vmem:[#allocation10 + $0x28] sm:$0xff]
    %v854 = vld [vmem:[#allocation10 + $0x30] sm:$0xff]
    %v855 = vld [vmem:[#allocation10 + $0x38] sm:$0xff]
    %v856 = vld [vmem:[#allocation10 + $0x40] sm:$0xff]
    %v857 = vld [vmem:[#allocation10 + $0x48] sm:$0xff]
    %v858 = vld [vmem:[#allocation10 + $0x50] sm:$0xff]
    %v859 = vld [vmem:[#allocation10 + $0x58] sm:$0xff]
    %v860 = vld [vmem:[#allocation10 + $0x60] sm:$0xff]
    %v861 = vld [vmem:[#allocation10 + $0x68] sm:$0xff]
    %v862 = vld [vmem:[#allocation10 + $0x70] sm:$0xff]
    %v863 = vld [vmem:[#allocation10 + $0x78] sm:$0xff]
    %v864 = vld [vmem:[#allocation11] sm:$0x3]
    %v866 = vlaneseq
    %v867 = vshrl.u32 %v866, 7
    %v868 = vsub.s32 0, %v867
    %v869 = vrot.slane %v864, %v868
    %v870 = vlaneseq
    %v871 = vshrl.u32 %v870, 7
    %v872 = vsub.s32 1, %v871
    %v873 = vrot.slane %v864, %v872
    %v892 = vunpack.c.l.b16 %v848
    %v893 = vunpack.c.h.b16 %v848
    %v894 = vunpack.c.l.b16 %v849
    %v895 = vunpack.c.h.b16 %v849
    %v896 = vunpack.c.l.b16 %v850
    %v897 = vunpack.c.h.b16 %v850
    %v898 = vunpack.c.l.b16 %v851
    %v899 = vunpack.c.h.b16 %v851
    %v900 = vunpack.c.l.b16 %v852
    %v901 = vunpack.c.h.b16 %v852
    %v902 = vunpack.c.l.b16 %v853
    %v903 = vunpack.c.h.b16 %v853
    %v904 = vunpack.c.l.b16 %v854
    %v905 = vunpack.c.h.b16 %v854
    %v906 = vunpack.c.l.b16 %v855
    %v907 = vunpack.c.h.b16 %v855
    %v908 = vunpack.c.l.b16 %v856
    %v909 = vunpack.c.h.b16 %v856
    %v910 = vunpack.c.l.b16 %v857
    %v911 = vunpack.c.h.b16 %v857
    %v912 = vunpack.c.l.b16 %v858
    %v913 = vunpack.c.h.b16 %v858
    %v914 = vunpack.c.l.b16 %v859
    %v915 = vunpack.c.h.b16 %v859
    %v916 = vunpack.c.l.b16 %v860
    %v917 = vunpack.c.h.b16 %v860
    %v918 = vunpack.c.l.b16 %v861
    %v919 = vunpack.c.h.b16 %v861
    %v920 = vunpack.c.l.b16 %v862
    %v921 = vunpack.c.h.b16 %v862
    %v922 = vunpack.c.l.b16 %v863
    %v923 = vunpack.c.h.b16 %v863
    %v924 = vpack.c.b16 %v894, %v892
    %v925 = vpack.c.b16 %v895, %v893
    %v926 = vpack.c.b16 %v898, %v896
    %v927 = vpack.c.b16 %v899, %v897
    %v928 = vpack.c.b16 %v902, %v900
    %v929 = vpack.c.b16 %v903, %v901
    %v930 = vpack.c.b16 %v906, %v904
    %v931 = vpack.c.b16 %v907, %v905
    %v932 = vpack.c.b16 %v910, %v908
    %v933 = vpack.c.b16 %v911, %v909
    %v934 = vpack.c.b16 %v914, %v912
    %v935 = vpack.c.b16 %v915, %v913
    %v936 = vpack.c.b16 %v918, %v916
    %v937 = vpack.c.b16 %v919, %v917
    %v938 = vpack.c.b16 %v922, %v920
    %v939 = vpack.c.b16 %v923, %v921
    %956 = vmatprep.subr.bf16.mxu0 %v925
    %957 = vmatpush1.bf16.msra.mxu0 %v924
    %958 = vmatprep.subr.bf16.mxu0 %v927
    %959 = vmatpush1.bf16.msra.mxu0 %v926
    %960 = vmatprep.subr.bf16.mxu0 %v929
    %961 = vmatpush1.bf16.msra.mxu0 %v928
    %962 = vmatprep.subr.bf16.mxu0 %v931
    %963 = vmatpush1.bf16.msra.mxu0 %v930
    %964 = vmatprep.subr.bf16.mxu0 %v933
    %965 = vmatpush1.bf16.msra.mxu0 %v932
    %966 = vmatprep.subr.bf16.mxu0 %v935
    %967 = vmatpush1.bf16.msra.mxu0 %v934
    %968 = vmatprep.subr.bf16.mxu0 %v937
    %969 = vmatpush1.bf16.msra.mxu0 %v936
    %970 = vmatprep.subr.bf16.mxu0 %v939
    %971 = vmatpush1.bf16.msra.mxu0 %v938
    %972 = vmatprep.subr.bf16.mxu0 0
    %973 = vmatpush1.bf16.msra.mxu0 0
    %974 = vmatprep.subr.bf16.mxu0 0
    %975 = vmatpush1.bf16.msra.mxu0 0
    %976 = vmatprep.subr.bf16.mxu0 0
    %977 = vmatpush1.bf16.msra.mxu0 0
    %978 = vmatprep.subr.bf16.mxu0 0
    %979 = vmatpush1.bf16.msra.mxu0 0
    %980 = vmatprep.subr.bf16.mxu0 0
    %981 = vmatpush1.bf16.msra.mxu0 0
    %982 = vmatprep.subr.bf16.mxu0 0
    %983 = vmatpush1.bf16.msra.mxu0 0
    %984 = vmatprep.subr.bf16.mxu0 0
    %985 = vmatpush1.bf16.msra.mxu0 0
    %986 = vmatprep.subr.bf16.mxu0 0
    %987 = vmatpush1.bf16.msra.mxu0 0
    %988 = vmatprep.mubr.bf16.mxu0 0
    %989 = vmatmul.mubr.bf16.gmra.mrb[0].mxu0 %v847
    %v990 = vpop.f32.mrb[0].mxu0
    %v991 = vadd.f32 %v869, %v990
    %v992 = vpop.f32.mrb[0].mxu0
    %v993 = vadd.f32 %v873, %v992
    %v994 = vpop.f32.mrb[0].mxu0
    %v995 = vpop.f32.mrb[0].mxu0
    %996 = vdwg.mxu0
    %v997 = vmul.f32 %v993, 0.5
    %v998 = vmul.f32 %v997, 1.442695
    %v999 = vpow.pop %v998
    %v1000 = vmul.f32 %v138, %v999
    %v1001 = vadd.f32 %v991, %v1000
    %v1002 = vpack.c.bf16 %v1001, %v1001
    %v1003 = vld [vmem:[#allocation13] sm:$0xff]
    %v1004 = vld [vmem:[#allocation13 + $0x8] sm:$0xff]
    %v1005 = vld [vmem:[#allocation13 + $0x10] sm:$0xff]
    %v1006 = vld [vmem:[#allocation13 + $0x18] sm:$0xff]
    %v1007 = vld [vmem:[#allocation13 + $0x20] sm:$0xff]
    %v1008 = vld [vmem:[#allocation13 + $0x28] sm:$0xff]
    %v1009 = vld [vmem:[#allocation13 + $0x30] sm:$0xff]
    %v1010 = vld [vmem:[#allocation13 + $0x38] sm:$0xff]
    %v1011 = vld [vmem:[#allocation13 + $0x40] sm:$0xff]
    %v1012 = vld [vmem:[#allocation13 + $0x48] sm:$0xff]
    %v1013 = vld [vmem:[#allocation13 + $0x50] sm:$0xff]
    %v1014 = vld [vmem:[#allocation13 + $0x58] sm:$0xff]
    %v1015 = vld [vmem:[#allocation13 + $0x60] sm:$0xff]
    %v1016 = vld [vmem:[#allocation13 + $0x68] sm:$0xff]
    %v1017 = vld [vmem:[#allocation13 + $0x70] sm:$0xff]
    %v1018 = vld [vmem:[#allocation13 + $0x78] sm:$0xff]
    %v1019 = vld [vmem:[#allocation13 + $0x80] sm:$0xff]
    %v1020 = vld [vmem:[#allocation13 + $0x88] sm:$0xff]
    %v1021 = vld [vmem:[#allocation13 + $0x90] sm:$0xff]
    %v1022 = vld [vmem:[#allocation13 + $0x98] sm:$0xff]
    %v1023 = vld [vmem:[#allocation13 + $0xa0] sm:$0xff]
    %v1024 = vld [vmem:[#allocation13 + $0xa8] sm:$0xff]
    %v1025 = vld [vmem:[#allocation13 + $0xb0] sm:$0xff]
    %v1026 = vld [vmem:[#allocation13 + $0xb8] sm:$0xff]
    %v1027 = vld [vmem:[#allocation13 + $0xc0] sm:$0xff]
    %v1028 = vld [vmem:[#allocation13 + $0xc8] sm:$0xff]
    %v1029 = vld [vmem:[#allocation13 + $0xd0] sm:$0xff]
    %v1030 = vld [vmem:[#allocation13 + $0xd8] sm:$0xff]
    %v1031 = vld [vmem:[#allocation13 + $0xe0] sm:$0xff]
    %v1032 = vld [vmem:[#allocation13 + $0xe8] sm:$0xff]
    %v1033 = vld [vmem:[#allocation13 + $0xf0] sm:$0xff]
    %v1034 = vld [vmem:[#allocation13 + $0xf8] sm:$0xff]
    %v1035 = vld [vmem:[#allocation13 + $0x100] sm:$0xff]
    %v1036 = vld [vmem:[#allocation13 + $0x108] sm:$0xff]
    %v1037 = vld [vmem:[#allocation13 + $0x110] sm:$0xff]
    %v1038 = vld [vmem:[#allocation13 + $0x118] sm:$0xff]
    %v1039 = vld [vmem:[#allocation13 + $0x120] sm:$0xff]
    %v1040 = vld [vmem:[#allocation13 + $0x128] sm:$0xff]
    %v1041 = vld [vmem:[#allocation13 + $0x130] sm:$0xff]
    %v1042 = vld [vmem:[#allocation13 + $0x138] sm:$0xff]
    %v1043 = vld [vmem:[#allocation13 + $0x140] sm:$0xff]
    %v1044 = vld [vmem:[#allocation13 + $0x148] sm:$0xff]
    %v1045 = vld [vmem:[#allocation13 + $0x150] sm:$0xff]
    %v1046 = vld [vmem:[#allocation13 + $0x158] sm:$0xff]
    %v1047 = vld [vmem:[#allocation13 + $0x160] sm:$0xff]
    %v1048 = vld [vmem:[#allocation13 + $0x168] sm:$0xff]
    %v1049 = vld [vmem:[#allocation13 + $0x170] sm:$0xff]
    %v1050 = vld [vmem:[#allocation13 + $0x178] sm:$0xff]
    %v1051 = vld [vmem:[#allocation13 + $0x180] sm:$0xff]
    %v1052 = vld [vmem:[#allocation13 + $0x188] sm:$0xff]
    %v1053 = vld [vmem:[#allocation13 + $0x190] sm:$0xff]
    %v1054 = vld [vmem:[#allocation13 + $0x198] sm:$0xff]
    %v1055 = vld [vmem:[#allocation13 + $0x1a0] sm:$0xff]
    %v1056 = vld [vmem:[#allocation13 + $0x1a8] sm:$0xff]
    %v1057 = vld [vmem:[#allocation13 + $0x1b0] sm:$0xff]
    %v1058 = vld [vmem:[#allocation13 + $0x1b8] sm:$0xff]
    %v1059 = vld [vmem:[#allocation13 + $0x1c0] sm:$0xff]
    %v1060 = vld [vmem:[#allocation13 + $0x1c8] sm:$0xff]
    %v1061 = vld [vmem:[#allocation13 + $0x1d0] sm:$0xff]
    %v1062 = vld [vmem:[#allocation13 + $0x1d8] sm:$0xff]
    %v1063 = vld [vmem:[#allocation13 + $0x1e0] sm:$0xff]
    %v1064 = vld [vmem:[#allocation13 + $0x1e8] sm:$0xff]
    %v1065 = vld [vmem:[#allocation13 + $0x1f0] sm:$0xff]
    %v1066 = vld [vmem:[#allocation13 + $0x1f8] sm:$0xff]
    %v1067 = vld [vmem:[#allocation14] sm:$0xff]
    %v1069 = vlaneseq
    %v1070 = vshrl.u32 %v1069, 7
    %v1071 = vsub.s32 0, %v1070
    %v1072 = vrot.slane %v1067, %v1071
    %v1073 = vlaneseq
    %v1074 = vshrl.u32 %v1073, 7
    %v1075 = vsub.s32 1, %v1074
    %v1076 = vrot.slane %v1067, %v1075
    %v1077 = vlaneseq
    %v1078 = vshrl.u32 %v1077, 7
    %v1079 = vsub.s32 2, %v1078
    %v1080 = vrot.slane %v1067, %v1079
    %v1081 = vlaneseq
    %v1082 = vshrl.u32 %v1081, 7
    %v1083 = vsub.s32 3, %v1082
    %v1084 = vrot.slane %v1067, %v1083
    %v1085 = vlaneseq
    %v1086 = vshrl.u32 %v1085, 7
    %v1087 = vsub.s32 4, %v1086
    %v1088 = vrot.slane %v1067, %v1087
    %v1089 = vlaneseq
    %v1090 = vshrl.u32 %v1089, 7
    %v1091 = vsub.s32 5, %v1090
    %v1092 = vrot.slane %v1067, %v1091
    %v1093 = vlaneseq
    %v1094 = vshrl.u32 %v1093, 7
    %v1095 = vsub.s32 6, %v1094
    %v1096 = vrot.slane %v1067, %v1095
    %v1097 = vlaneseq
    %v1098 = vshrl.u32 %v1097, 7
    %v1099 = vsub.s32 7, %v1098
    %v1100 = vrot.slane %v1067, %v1099
    %v1173 = vunpack.c.l.b16 %v1003
    %v1174 = vunpack.c.h.b16 %v1003
    %v1175 = vunpack.c.l.b16 %v1004
    %v1176 = vunpack.c.h.b16 %v1004
    %v1177 = vunpack.c.l.b16 %v1005
    %v1178 = vunpack.c.h.b16 %v1005
    %v1179 = vunpack.c.l.b16 %v1006
    %v1180 = vunpack.c.h.b16 %v1006
    %v1181 = vunpack.c.l.b16 %v1007
    %v1182 = vunpack.c.h.b16 %v1007
    %v1183 = vunpack.c.l.b16 %v1008
    %v1184 = vunpack.c.h.b16 %v1008
    %v1185 = vunpack.c.l.b16 %v1009
    %v1186 = vunpack.c.h.b16 %v1009
    %v1187 = vunpack.c.l.b16 %v1010
    %v1188 = vunpack.c.h.b16 %v1010
    %v1189 = vunpack.c.l.b16 %v1011
    %v1190 = vunpack.c.h.b16 %v1011
    %v1191 = vunpack.c.l.b16 %v1012
    %v1192 = vunpack.c.h.b16 %v1012
    %v1193 = vunpack.c.l.b16 %v1013
    %v1194 = vunpack.c.h.b16 %v1013
    %v1195 = vunpack.c.l.b16 %v1014
    %v1196 = vunpack.c.h.b16 %v1014
    %v1197 = vunpack.c.l.b16 %v1015
    %v1198 = vunpack.c.h.b16 %v1015
    %v1199 = vunpack.c.l.b16 %v1016
    %v1200 = vunpack.c.h.b16 %v1016
    %v1201 = vunpack.c.l.b16 %v1017
    %v1202 = vunpack.c.h.b16 %v1017
    %v1203 = vunpack.c.l.b16 %v1018
    %v1204 = vunpack.c.h.b16 %v1018
    %v1205 = vunpack.c.l.b16 %v1019
    %v1206 = vunpack.c.h.b16 %v1019
    %v1207 = vunpack.c.l.b16 %v1020
    %v1208 = vunpack.c.h.b16 %v1020
    %v1209 = vunpack.c.l.b16 %v1021
    %v1210 = vunpack.c.h.b16 %v1021
    %v1211 = vunpack.c.l.b16 %v1022
    %v1212 = vunpack.c.h.b16 %v1022
    %v1213 = vunpack.c.l.b16 %v1023
    %v1214 = vunpack.c.h.b16 %v1023
    %v1215 = vunpack.c.l.b16 %v1024
    %v1216 = vunpack.c.h.b16 %v1024
    %v1217 = vunpack.c.l.b16 %v1025
    %v1218 = vunpack.c.h.b16 %v1025
    %v1219 = vunpack.c.l.b16 %v1026
    %v1220 = vunpack.c.h.b16 %v1026
    %v1221 = vunpack.c.l.b16 %v1027
    %v1222 = vunpack.c.h.b16 %v1027
    %v1223 = vunpack.c.l.b16 %v1028
    %v1224 = vunpack.c.h.b16 %v1028
    %v1225 = vunpack.c.l.b16 %v1029
    %v1226 = vunpack.c.h.b16 %v1029
    %v1227 = vunpack.c.l.b16 %v1030
    %v1228 = vunpack.c.h.b16 %v1030
    %v1229 = vunpack.c.l.b16 %v1031
    %v1230 = vunpack.c.h.b16 %v1031
    %v1231 = vunpack.c.l.b16 %v1032
    %v1232 = vunpack.c.h.b16 %v1032
    %v1233 = vunpack.c.l.b16 %v1033
    %v1234 = vunpack.c.h.b16 %v1033
    %v1235 = vunpack.c.l.b16 %v1034
    %v1236 = vunpack.c.h.b16 %v1034
    %v1237 = vunpack.c.l.b16 %v1035
    %v1238 = vunpack.c.h.b16 %v1035
    %v1239 = vunpack.c.l.b16 %v1036
    %v1240 = vunpack.c.h.b16 %v1036
    %v1241 = vunpack.c.l.b16 %v1037
    %v1242 = vunpack.c.h.b16 %v1037
    %v1243 = vunpack.c.l.b16 %v1038
    %v1244 = vunpack.c.h.b16 %v1038
    %v1245 = vunpack.c.l.b16 %v1039
    %v1246 = vunpack.c.h.b16 %v1039
    %v1247 = vunpack.c.l.b16 %v1040
    %v1248 = vunpack.c.h.b16 %v1040
    %v1249 = vunpack.c.l.b16 %v1041
    %v1250 = vunpack.c.h.b16 %v1041
    %v1251 = vunpack.c.l.b16 %v1042
    %v1252 = vunpack.c.h.b16 %v1042
    %v1253 = vunpack.c.l.b16 %v1043
    %v1254 = vunpack.c.h.b16 %v1043
    %v1255 = vunpack.c.l.b16 %v1044
    %v1256 = vunpack.c.h.b16 %v1044
    %v1257 = vunpack.c.l.b16 %v1045
    %v1258 = vunpack.c.h.b16 %v1045
    %v1259 = vunpack.c.l.b16 %v1046
    %v1260 = vunpack.c.h.b16 %v1046
    %v1261 = vunpack.c.l.b16 %v1047
    %v1262 = vunpack.c.h.b16 %v1047
    %v1263 = vunpack.c.l.b16 %v1048
    %v1264 = vunpack.c.h.b16 %v1048
    %v1265 = vunpack.c.l.b16 %v1049
    %v1266 = vunpack.c.h.b16 %v1049
    %v1267 = vunpack.c.l.b16 %v1050
    %v1268 = vunpack.c.h.b16 %v1050
    %v1269 = vunpack.c.l.b16 %v1051
    %v1270 = vunpack.c.h.b16 %v1051
    %v1271 = vunpack.c.l.b16 %v1052
    %v1272 = vunpack.c.h.b16 %v1052
    %v1273 = vunpack.c.l.b16 %v1053
    %v1274 = vunpack.c.h.b16 %v1053
    %v1275 = vunpack.c.l.b16 %v1054
    %v1276 = vunpack.c.h.b16 %v1054
    %v1277 = vunpack.c.l.b16 %v1055
    %v1278 = vunpack.c.h.b16 %v1055
    %v1279 = vunpack.c.l.b16 %v1056
    %v1280 = vunpack.c.h.b16 %v1056
    %v1281 = vunpack.c.l.b16 %v1057
    %v1282 = vunpack.c.h.b16 %v1057
    %v1283 = vunpack.c.l.b16 %v1058
    %v1284 = vunpack.c.h.b16 %v1058
    %v1285 = vunpack.c.l.b16 %v1059
    %v1286 = vunpack.c.h.b16 %v1059
    %v1287 = vunpack.c.l.b16 %v1060
    %v1288 = vunpack.c.h.b16 %v1060
    %v1289 = vunpack.c.l.b16 %v1061
    %v1290 = vunpack.c.h.b16 %v1061
    %v1291 = vunpack.c.l.b16 %v1062
    %v1292 = vunpack.c.h.b16 %v1062
    %v1293 = vunpack.c.l.b16 %v1063
    %v1294 = vunpack.c.h.b16 %v1063
    %v1295 = vunpack.c.l.b16 %v1064
    %v1296 = vunpack.c.h.b16 %v1064
    %v1297 = vunpack.c.l.b16 %v1065
    %v1298 = vunpack.c.h.b16 %v1065
    %v1299 = vunpack.c.l.b16 %v1066
    %v1300 = vunpack.c.h.b16 %v1066
    %v1301 = vpack.c.b16 %v1181, %v1173
    %v1302 = vpack.c.b16 %v1182, %v1174
    %v1303 = vpack.c.b16 %v1183, %v1175
    %v1304 = vpack.c.b16 %v1184, %v1176
    %v1305 = vpack.c.b16 %v1185, %v1177
    %v1306 = vpack.c.b16 %v1186, %v1178
    %v1307 = vpack.c.b16 %v1187, %v1179
    %v1308 = vpack.c.b16 %v1188, %v1180
    %v1309 = vpack.c.b16 %v1197, %v1189
    %v1310 = vpack.c.b16 %v1198, %v1190
    %v1311 = vpack.c.b16 %v1199, %v1191
    %v1312 = vpack.c.b16 %v1200, %v1192
    %v1313 = vpack.c.b16 %v1201, %v1193
    %v1314 = vpack.c.b16 %v1202, %v1194
    %v1315 = vpack.c.b16 %v1203, %v1195
    %v1316 = vpack.c.b16 %v1204, %v1196
    %v1317 = vpack.c.b16 %v1213, %v1205
    %v1318 = vpack.c.b16 %v1214, %v1206
    %v1319 = vpack.c.b16 %v1215, %v1207
    %v1320 = vpack.c.b16 %v1216, %v1208
    %v1321 = vpack.c.b16 %v1217, %v1209
    %v1322 = vpack.c.b16 %v1218, %v1210
    %v1323 = vpack.c.b16 %v1219, %v1211
    %v1324 = vpack.c.b16 %v1220, %v1212
    %v1325 = vpack.c.b16 %v1229, %v1221
    %v1326 = vpack.c.b16 %v1230, %v1222
    %v1327 = vpack.c.b16 %v1231, %v1223
    %v1328 = vpack.c.b16 %v1232, %v1224
    %v1329 = vpack.c.b16 %v1233, %v1225
    %v1330 = vpack.c.b16 %v1234, %v1226
    %v1331 = vpack.c.b16 %v1235, %v1227
    %v1332 = vpack.c.b16 %v1236, %v1228
    %v1333 = vpack.c.b16 %v1245, %v1237
    %v1334 = vpack.c.b16 %v1246, %v1238
    %v1335 = vpack.c.b16 %v1247, %v1239
    %v1336 = vpack.c.b16 %v1248, %v1240
    %v1337 = vpack.c.b16 %v1249, %v1241
    %v1338 = vpack.c.b16 %v1250, %v1242
    %v1339 = vpack.c.b16 %v1251, %v1243
    %v1340 = vpack.c.b16 %v1252, %v1244
    %v1341 = vpack.c.b16 %v1261, %v1253
    %v1342 = vpack.c.b16 %v1262, %v1254
    %v1343 = vpack.c.b16 %v1263, %v1255
    %v1344 = vpack.c.b16 %v1264, %v1256
    %v1345 = vpack.c.b16 %v1265, %v1257
    %v1346 = vpack.c.b16 %v1266, %v1258
    %v1347 = vpack.c.b16 %v1267, %v1259
    %v1348 = vpack.c.b16 %v1268, %v1260
    %v1349 = vpack.c.b16 %v1277, %v1269
    %v1350 = vpack.c.b16 %v1278, %v1270
    %v1351 = vpack.c.b16 %v1279, %v1271
    %v1352 = vpack.c.b16 %v1280, %v1272
    %v1353 = vpack.c.b16 %v1281, %v1273
    %v1354 = vpack.c.b16 %v1282, %v1274
    %v1355 = vpack.c.b16 %v1283, %v1275
    %v1356 = vpack.c.b16 %v1284, %v1276
    %v1357 = vpack.c.b16 %v1293, %v1285
    %v1358 = vpack.c.b16 %v1294, %v1286
    %v1359 = vpack.c.b16 %v1295, %v1287
    %v1360 = vpack.c.b16 %v1296, %v1288
    %v1361 = vpack.c.b16 %v1297, %v1289
    %v1362 = vpack.c.b16 %v1298, %v1290
    %v1363 = vpack.c.b16 %v1299, %v1291
    %v1364 = vpack.c.b16 %v1300, %v1292
    %1429 = vmatprep.subr.bf16.mxu0 %v1302
    %1430 = vmatpush1.bf16.msra.mxu0 %v1301
    %1431 = vmatprep.subr.bf16.mxu0 %v1310
    %1432 = vmatpush1.bf16.msra.mxu0 %v1309
    %1433 = vmatprep.subr.bf16.mxu0 %v1318
    %1434 = vmatpush1.bf16.msra.mxu0 %v1317
    %1435 = vmatprep.subr.bf16.mxu0 %v1326
    %1436 = vmatpush1.bf16.msra.mxu0 %v1325
    %1437 = vmatprep.subr.bf16.mxu0 %v1334
    %1438 = vmatpush1.bf16.msra.mxu0 %v1333
    %1439 = vmatprep.subr.bf16.mxu0 %v1342
    %1440 = vmatpush1.bf16.msra.mxu0 %v1341
    %1441 = vmatprep.subr.bf16.mxu0 %v1350
    %1442 = vmatpush1.bf16.msra.mxu0 %v1349
    %1443 = vmatprep.subr.bf16.mxu0 %v1358
    %1444 = vmatpush1.bf16.msra.mxu0 %v1357
    %1445 = vmatprep.subr.bf16.mxu0 0
    %1446 = vmatpush1.bf16.msra.mxu0 0
    %1447 = vmatprep.subr.bf16.mxu0 0
    %1448 = vmatpush1.bf16.msra.mxu0 0
    %1449 = vmatprep.subr.bf16.mxu0 0
    %1450 = vmatpush1.bf16.msra.mxu0 0
    %1451 = vmatprep.subr.bf16.mxu0 0
    %1452 = vmatpush1.bf16.msra.mxu0 0
    %1453 = vmatprep.subr.bf16.mxu0 0
    %1454 = vmatpush1.bf16.msra.mxu0 0
    %1455 = vmatprep.subr.bf16.mxu0 0
    %1456 = vmatpush1.bf16.msra.mxu0 0
    %1457 = vmatprep.subr.bf16.mxu0 0
    %1458 = vmatpush1.bf16.msra.mxu0 0
    %1459 = vmatprep.subr.bf16.mxu0 0
    %1460 = vmatpush1.bf16.msra.mxu0 0
    %1461 = vmatprep.mubr.bf16.mxu0 0
    %1462 = vmatmul.mubr.bf16.gmra.mrb[0].mxu0 %v1002
    %v1463 = vpop.f32.mrb[0].mxu0
    %v1464 = vadd.f32 %v1072, %v1463
    %v1465 = vpop.f32.mrb[0].mxu0
    %v1466 = vadd.f32 %v1076, %v1465
    %v1467 = vpop.f32.mrb[0].mxu0
    %v1468 = vpop.f32.mrb[0].mxu0
    %1469 = vdwg.mxu0
    %1470 = vmatprep.subr.bf16.mxu0 %v1304
    %1471 = vmatpush1.bf16.msra.mxu0 %v1303
    %1472 = vmatprep.subr.bf16.mxu0 %v1312
    %1473 = vmatpush1.bf16.msra.mxu0 %v1311
    %1474 = vmatprep.subr.bf16.mxu0 %v1320
    %1475 = vmatpush1.bf16.msra.mxu0 %v1319
    %1476 = vmatprep.subr.bf16.mxu0 %v1328
    %1477 = vmatpush1.bf16.msra.mxu0 %v1327
    %1478 = vmatprep.subr.bf16.mxu0 %v1336
    %1479 = vmatpush1.bf16.msra.mxu0 %v1335
    %1480 = vmatprep.subr.bf16.mxu0 %v1344
    %1481 = vmatpush1.bf16.msra.mxu0 %v1343
    %1482 = vmatprep.subr.bf16.mxu0 %v1352
    %1483 = vmatpush1.bf16.msra.mxu0 %v1351
    %1484 = vmatprep.subr.bf16.mxu0 %v1360
    %1485 = vmatpush1.bf16.msra.mxu0 %v1359
    %1486 = vmatprep.subr.bf16.mxu0 0
    %1487 = vmatpush1.bf16.msra.mxu0 0
    %1488 = vmatprep.subr.bf16.mxu0 0
    %1489 = vmatpush1.bf16.msra.mxu0 0
    %1490 = vmatprep.subr.bf16.mxu0 0
    %1491 = vmatpush1.bf16.msra.mxu0 0
    %1492 = vmatprep.subr.bf16.mxu0 0
    %1493 = vmatpush1.bf16.msra.mxu0 0
    %1494 = vmatprep.subr.bf16.mxu0 0
    %1495 = vmatpush1.bf16.msra.mxu0 0
    %1496 = vmatprep.subr.bf16.mxu0 0
    %1497 = vmatpush1.bf16.msra.mxu0 0
    %1498 = vmatprep.subr.bf16.mxu0 0
    %1499 = vmatpush1.bf16.msra.mxu0 0
    %1500 = vmatprep.subr.bf16.mxu0 0
    %1501 = vmatpush1.bf16.msra.mxu0 0
    %1502 = vmatprep.mubr.bf16.mxu0 0
    %1503 = vmatmul.mubr.bf16.gmra.mrb[0].mxu0 %v1002
    %v1504 = vpop.f32.mrb[0].mxu0
    %v1505 = vadd.f32 %v1080, %v1504
    %v1506 = vpop.f32.mrb[0].mxu0
    %v1507 = vadd.f32 %v1084, %v1506
    %v1508 = vpop.f32.mrb[0].mxu0
    %v1509 = vpop.f32.mrb[0].mxu0
    %1510 = vdwg.mxu0
    %1511 = vmatprep.subr.bf16.mxu0 %v1306
    %1512 = vmatpush1.bf16.msra.mxu0 %v1305
    %1513 = vmatprep.subr.bf16.mxu0 %v1314
    %1514 = vmatpush1.bf16.msra.mxu0 %v1313
    %1515 = vmatprep.subr.bf16.mxu0 %v1322
    %1516 = vmatpush1.bf16.msra.mxu0 %v1321
    %1517 = vmatprep.subr.bf16.mxu0 %v1330
    %1518 = vmatpush1.bf16.msra.mxu0 %v1329
    %1519 = vmatprep.subr.bf16.mxu0 %v1338
    %1520 = vmatpush1.bf16.msra.mxu0 %v1337
    %1521 = vmatprep.subr.bf16.mxu0 %v1346
    %1522 = vmatpush1.bf16.msra.mxu0 %v1345
    %1523 = vmatprep.subr.bf16.mxu0 %v1354
    %1524 = vmatpush1.bf16.msra.mxu0 %v1353
    %1525 = vmatprep.subr.bf16.mxu0 %v1362
    %1526 = vmatpush1.bf16.msra.mxu0 %v1361
    %1527 = vmatprep.subr.bf16.mxu0 0
    %1528 = vmatpush1.bf16.msra.mxu0 0
    %1529 = vmatprep.subr.bf16.mxu0 0
    %1530 = vmatpush1.bf16.msra.mxu0 0
    %1531 = vmatprep.subr.bf16.mxu0 0
    %1532 = vmatpush1.bf16.msra.mxu0 0
    %1533 = vmatprep.subr.bf16.mxu0 0
    %1534 = vmatpush1.bf16.msra.mxu0 0
    %1535 = vmatprep.subr.bf16.mxu0 0
    %1536 = vmatpush1.bf16.msra.mxu0 0
    %1537 = vmatprep.subr.bf16.mxu0 0
    %1538 = vmatpush1.bf16.msra.mxu0 0
    %1539 = vmatprep.subr.bf16.mxu0 0
    %1540 = vmatpush1.bf16.msra.mxu0 0
    %1541 = vmatprep.subr.bf16.mxu0 0
    %1542 = vmatpush1.bf16.msra.mxu0 0
    %1543 = vmatprep.mubr.bf16.mxu0 0
    %1544 = vmatmul.mubr.bf16.gmra.mrb[0].mxu0 %v1002
    %v1545 = vpop.f32.mrb[0].mxu0
    %v1546 = vadd.f32 %v1088, %v1545
    %v1547 = vpop.f32.mrb[0].mxu0
    %v1548 = vadd.f32 %v1092, %v1547
    %v1549 = vpop.f32.mrb[0].mxu0
    %v1550 = vpop.f32.mrb[0].mxu0
    %1551 = vdwg.mxu0
    %1552 = vmatprep.subr.bf16.mxu0 %v1308
    %1553 = vmatpush1.bf16.msra.mxu0 %v1307
    %1554 = vmatprep.subr.bf16.mxu0 %v1316
    %1555 = vmatpush1.bf16.msra.mxu0 %v1315
    %1556 = vmatprep.subr.bf16.mxu0 %v1324
    %1557 = vmatpush1.bf16.msra.mxu0 %v1323
    %1558 = vmatprep.subr.bf16.mxu0 %v1332
    %1559 = vmatpush1.bf16.msra.mxu0 %v1331
    %1560 = vmatprep.subr.bf16.mxu0 %v1340
    %1561 = vmatpush1.bf16.msra.mxu0 %v1339
    %1562 = vmatprep.subr.bf16.mxu0 %v1348
    %1563 = vmatpush1.bf16.msra.mxu0 %v1347
    %1564 = vmatprep.subr.bf16.mxu0 %v1356
    %1565 = vmatpush1.bf16.msra.mxu0 %v1355
    %1566 = vmatprep.subr.bf16.mxu0 %v1364
    %1567 = vmatpush1.bf16.msra.mxu0 %v1363
    %1568 = vmatprep.subr.bf16.mxu0 0
    %1569 = vmatpush1.bf16.msra.mxu0 0
    %1570 = vmatprep.subr.bf16.mxu0 0
    %1571 = vmatpush1.bf16.msra.mxu0 0
    %1572 = vmatprep.subr.bf16.mxu0 0
    %1573 = vmatpush1.bf16.msra.mxu0 0
    %1574 = vmatprep.subr.bf16.mxu0 0
    %1575 = vmatpush1.bf16.msra.mxu0 0
    %1576 = vmatprep.subr.bf16.mxu0 0
    %1577 = vmatpush1.bf16.msra.mxu0 0
    %1578 = vmatprep.subr.bf16.mxu0 0
    %1579 = vmatpush1.bf16.msra.mxu0 0
    %1580 = vmatprep.subr.bf16.mxu0 0
    %1581 = vmatpush1.bf16.msra.mxu0 0
    %1582 = vmatprep.subr.bf16.mxu0 0
    %1583 = vmatpush1.bf16.msra.mxu0 0
    %1584 = vmatprep.mubr.bf16.mxu0 0
    %1585 = vmatmul.mubr.bf16.gmra.mrb[0].mxu0 %v1002
    %v1586 = vpop.f32.mrb[0].mxu0
    %v1587 = vadd.f32 %v1096, %v1586
    %v1588 = vpop.f32.mrb[0].mxu0
    %v1589 = vadd.f32 %v1100, %v1588
    %v1590 = vpop.f32.mrb[0].mxu0
    %v1591 = vpop.f32.mrb[0].mxu0
    %1592 = vdwg.mxu0
    %1593 = vst [vmem:[#allocation16] sm:$0xff] %v1464
    %1594 = vst [vmem:[#allocation16 + $0x8] sm:$0xff] %v1466
    %1595 = vst [vmem:[#allocation16 + $0x10] sm:$0xff] %v1505
    %1596 = vst [vmem:[#allocation16 + $0x18] sm:$0xff] %v1507
    %1597 = vst [vmem:[#allocation16 + $0x20] sm:$0xff] %v1546
    %1598 = vst [vmem:[#allocation16 + $0x28] sm:$0xff] %v1548
    %1599 = vst [vmem:[#allocation16 + $0x30] sm:$0xff] %v1587
    %1600 = vst [vmem:[#allocation16 + $0x38] sm:$0xff] %v1589
    %1601 = vst [vmem:[#allocation17] sm:$0xff] %v991
    %1602 = vst [vmem:[#allocation19] sm:$0xff] %v993
    // Predicated region
    $region66: #{tpu_custom_call.1} parent=1 // pred_check
      _
    $region67: #{tpu_custom_call.1} parent=1 // pred_check_branch
      %1604 = sbr.rel (0) target = $region69
    $region68: #{tpu_custom_call.1} parent=1 // pred_region
      %s1606 = ssub.s32 1024, 1024
      %1607 = vsyncadd [#allocation4], %s1606
      %s1609 = sshll.u32 [#allocation16], 4
      %s1610 = int_to_ptr.vmem [resolvable:$true] %s1609
      %1612 = dma.vmem_to_hbm [thread:$0]  %s1610, 1024, %s8, [#allocation4]
    $region69: #{tpu_custom_call.1} parent=1 // pred_fallthru
      _
    // Predicated region
    $region70: #{tpu_custom_call.1} parent=1 // pred_check
      _
    $region71: #{tpu_custom_call.1} parent=1 // pred_check_branch
      %1614 = sbr.rel (0) target = $region73
    $region72: #{tpu_custom_call.1} parent=1 // pred_region
      %s1616 = ssub.s32 128, 128
      %1617 = vsyncadd [#allocation18], %s1616
      %s1619 = sshll.u32 [#allocation17], 4
      %s1620 = int_to_ptr.vmem [resolvable:$true] %s1619
      %1622 = dma.vmem_to_hbm [thread:$0]  %s1620, 128, %s9, [#allocation18]
    $region73: #{tpu_custom_call.1} parent=1 // pred_fallthru
      _
    // Predicated region
    $region74: #{tpu_custom_call.1} parent=1 // pred_check
      _
    $region75: #{tpu_custom_call.1} parent=1 // pred_check_branch
      %1624 = sbr.rel (0) target = $region77
    $region76: #{tpu_custom_call.1} parent=1 // pred_region
      %s1626 = ssub.s32 128, 128
      %1627 = vsyncadd [#allocation18], %s1626
      %s1629 = sshll.u32 [#allocation19], 4
      %s1630 = int_to_ptr.vmem [resolvable:$true] %s1629
      %1632 = dma.vmem_to_hbm [thread:$0]  %s1630, 128, %s10, [#allocation18]
    $region77: #{tpu_custom_call.1} parent=1 // pred_fallthru
      _
    // Predicated region
    $region78: #{tpu_custom_call.1} parent=1 // pred_check
      _
    $region79: #{tpu_custom_call.1} parent=1 // pred_check_branch
      %1634 = sbr.rel (0) target = $region81
    $region80: #{tpu_custom_call.1} parent=1 // pred_region
      %1635 = dma.done [#allocation4], 1024
    $region81: #{tpu_custom_call.1} parent=1 // pred_fallthru
      _
    // Predicated region
    $region82: #{tpu_custom_call.1} parent=1 // pred_check
      _
    $region83: #{tpu_custom_call.1} parent=1 // pred_check_branch
      %1637 = sbr.rel (0) target = $region85
    $region84: #{tpu_custom_call.1} parent=1 // pred_region
      %1638 = dma.done [#allocation18], 128
    $region85: #{tpu_custom_call.1} parent=1 // pred_fallthru
      _
    // Predicated region
    $region86: #{tpu_custom_call.1} parent=1 // pred_check
      _
    $region87: #{tpu_custom_call.1} parent=1 // pred_check_branch
      %1640 = sbr.rel (0) target = $region89
    $region88: #{tpu_custom_call.1} parent=1 // pred_region
      %1641 = dma.done [#allocation18], 128
    $region89: #{tpu_custom_call.1} parent=1 // pred_fallthru
      _
    %1642 = vsyncpa [#allocation3], 1
    %1643 = vsyncpa [#allocation6], 1
    %1644 = vsyncpa [#allocation9], 1
    %1645 = vsyncpa [#allocation12], 1
    %1646 = vsyncpa [#allocation15], 1
    %1647 = vsyncpa [#allocation4], 1
    %1648 = vsyncpa [#allocation18], 1

</llo_original>
